<compile_context>
chip_gen: v7x
topology: tpu7x:2x2x1
jax: 0.10.0
libtpu: 0.0.40
codegen_flags: <defaults>
</compile_context>

<pallas_src>
import jax
import jax.numpy as jnp
from jax import lax
from jax.experimental import pallas as pl
from jax.experimental.pallas import tpu as pltpu


# --------------------------------------------------------------------------- #
# Helpers
# --------------------------------------------------------------------------- #
def _pick_divisor(total: int, target: int) -> int:
    """Largest divisor of `total` that is <= `target` (total itself if small)."""
    if total <= target:
        return total
    for cand in range(target, 0, -1):
        if total % cand == 0:
            return cand
    return total


def _vmem_limit(resident_bytes: int) -> int:
    """vmem_limit_bytes from resident-buffer arithmetic + headroom, clamped to a
    generation-safe cap (v7x has 64 MiB physical VMEM per TensorCore)."""
    return int(min(max(2 * resident_bytes, 16 << 20), 64 << 20))


# --------------------------------------------------------------------------- #
# Kernel 1: decoder recurrence
# --------------------------------------------------------------------------- #
def make_decoder_core_kernel(n_layers: int):
    """Decoder recurrence for one (batch-chunk, T-chunk) tile.

    bf16 MXU operands, f32 accumulation; gate math and h/c state in f32.
    """
    n_slab = 3 + 2 * (n_layers - 1)  # fused (K, 4H) gate slabs per operand

    def kernel(tgt_ref, src_ref, h0_ref, c0_ref, *rest):
        slab_refs = rest[:n_slab]
        bias_refs = rest[n_slab:n_slab + n_layers]
        w_pe_ref = rest[n_slab + n_layers]       # (H, 2EncH)  proj_encoder^T
        w_ch_ref = rest[n_slab + n_layers + 1]   # (H, H)      combine rows on hidden
        w_cc_ref = rest[n_slab + n_layers + 2]   # (2EncH, H)  combine rows on context
        out_ref = rest[n_slab + n_layers + 3]
        h_sc, c_sc, ctx_sc = rest[n_slab + n_layers + 4:]

        Tc, Bc, _ = tgt_ref.shape
        H = h0_ref.shape[1]
        cdt = tgt_ref.dtype                      # bf16 MXU operand dtype

        # New batch chunk (first T-chunk): (re)load the initial state.
        @pl.when(pl.program_id(1) == 0)
        def _():
            h_sc[...] = h0_ref[...]
            c_sc[...] = c0_ref[...]
            ctx_sc[...] = jnp.zeros_like(ctx_sc)

        # Hoist loop-invariant bias broadcasts out of the time loop.
        biases = [jnp.broadcast_to(b[...], (Bc, 4 * H)) for b in bias_refs]

        def mm(a, w):                            # bf16 x bf16 -> f32 on the MXU
            return jnp.dot(a, w, preferred_element_type=jnp.float32)

        def step(t, carry):
            h, c, ctx = carry                    # f32 (Bc, H) state
            word = tgt_ref[t]                    # (Bc, E) bf16
            h_b = h.astype(cdt)
            x = None
            for l in range(n_layers):
                if l == 0:
                    w_word, w_ctx, w_hh = slab_refs[0], slab_refs[1], slab_refs[2]
                    pre = (mm(word, w_word[...]) + mm(ctx.astype(cdt), w_ctx[...])
                           + mm(h_b, w_hh[...]) + biases[0])
                else:
                    w_x = slab_refs[3 + 2 * (l - 1)]
                    w_hh = slab_refs[4 + 2 * (l - 1)]
                    pre = mm(x, w_x[...]) + mm(h_b, w_hh[...]) + biases[l]
                # Fused (Bc, 4H) pre-activation; gate order i, f, g, o.
                i_g = jax.nn.sigmoid(pre[:, 0:H])
                f_g = jax.nn.sigmoid(pre[:, H:2 * H])
                g_g = jnp.tanh(pre[:, 2 * H:3 * H])
                o_g = jax.nn.sigmoid(pre[:, 3 * H:4 * H])
                # Original module threads ONE (h, c) pair through stacked cells.
                c = f_g * c + i_g * g_g
                h = o_g * jnp.tanh(c)
                h_b = h.astype(cdt)
                x = h_b                          # dropout == identity (eval mode)

            # Attention (q = 1): project h per step instead of keeping a
            # resident (Bc, S, H) attn-score buffer; batched MXU contractions.
            hp = mm(h_b, w_pe_ref[...])                                  # (Bc, 2EncH) f32
            e = jnp.einsum('bqe,bse->bqs', hp[:, None, :].astype(cdt), src_ref[...],
                           preferred_element_type=jnp.float32)           # (Bc, 1, S)
            e = e - jnp.max(e, axis=-1, keepdims=True)
            p = jnp.exp(e)
            denom = jnp.sum(p, axis=-1, keepdims=True)
            alpha = p * pl.reciprocal(denom, approx=True)                # EUP divide
            ctx3 = jnp.einsum('bqs,bse->bqe', alpha.astype(cdt), src_ref[...],
                              preferred_element_type=jnp.float32)        # (Bc, 1, 2EncH)
            context = ctx3[:, 0, :]

            # TODO(synk): with 128-multiple H / 2EncH, fuse the combine into one
            # matmul via a (Bc, H+2EncH) VMEM slab (review item); kept split here.
            av = jnp.tanh(mm(h_b, w_ch_ref[...])
                          + mm(context.astype(cdt), w_cc_ref[...]))      # (Bc, H) f32
            out_ref[t] = av.astype(out_ref.dtype)
            return h, c, av                      # attentional vector -> prev_context

        h, c, ctx = lax.fori_loop(0, Tc, step,
                                  (h_sc[...], c_sc[...], ctx_sc[...]))
        # Carry the state to the next T-chunk.
        h_sc[...] = h
        c_sc[...] = c
        ctx_sc[...] = ctx

    return kernel


# --------------------------------------------------------------------------- #
# Kernel 2: vocab projection (tiled matmul, f32 accumulator)
# --------------------------------------------------------------------------- #
def vocab_proj_kernel(a_ref, b_ref, o_ref, acc_ref):
    @pl.when(pl.program_id(2) == 0)
    def _():
        acc_ref[...] = jnp.zeros_like(acc_ref)
    acc_ref[...] += jnp.dot(a_ref[...], b_ref[...],
                            preferred_element_type=jnp.float32)
    @pl.when(pl.program_id(2) == pl.num_programs(2) - 1)
    def _():
        o_ref[...] = acc_ref[...].astype(o_ref.dtype)


def vocab_projection(av2d, w_out_bf):
    M, K = av2d.shape
    _, V = w_out_bf.shape
    # 256/512-multiples are v6e/v7x-friendly; small demo dims fall back to full
    # extents.  TODO(synk): prefer 128-multiples on v5e (128-wide MXU).
    tm = _pick_divisor(M, 256)
    tn = _pick_divisor(V, 512)
    tk = _pick_divisor(K, 512)
    grid = (M // tm, V // tn, K // tk)
    resident = (2 * (tm * tk + tk * tn) * av2d.dtype.itemsize   # bf16 inputs, dbl-buffered
                + 2 * tm * tn * 4                               # f32 output, dbl-buffered
                + tm * tn * 4)                                  # f32 accumulator
    return pl.pallas_call(
        vocab_proj_kernel,
        out_shape=jax.ShapeDtypeStruct((M, V), jnp.float32),
        grid_spec=pltpu.PrefetchScalarGridSpec(
            num_scalar_prefetch=0,
            grid=grid,
            in_specs=[pl.BlockSpec((tm, tk), lambda i, j, k: (i, k)),
                      pl.BlockSpec((tk, tn), lambda i, j, k: (k, j))],
            out_specs=pl.BlockSpec((tm, tn), lambda i, j, k: (i, j)),
            scratch_shapes=[pltpu.VMEM((tm, tn), jnp.float32)]),
        compiler_params=pltpu.CompilerParams(
            dimension_semantics=("parallel", "parallel", "arbitrary"),
            vmem_limit_bytes=_vmem_limit(resident)),
    )(av2d, w_out_bf)


# --------------------------------------------------------------------------- #
# Wrapper
# --------------------------------------------------------------------------- #
def decoder_forward_pallas(tgt_emb, src_enc, h0, c0, lstm_weights, w_proj_enc,
                           w_combine, w_out):
    """tgt_emb: (T,B,E), src_enc: (B,S,2EncH), h0/c0: (B,H)  ->  (T,B,V) scores."""
    T, B, E = tgt_emb.shape
    _, S, E2 = src_enc.shape
    H = h0.shape[1]
    V = w_out.shape[1]
    n_layers = len(lstm_weights)
    bf = jnp.bfloat16

    # ---- Weight prep (once, outside the kernels) -----------------------------
    # Fused (K, 4H) gate slabs per operand; operands kept split so no per-step
    # lane concat of [word, prev_context] / [hidden, context].  bf16 MXU
    # operands, f32 biases.
    slabs, biases = [], []
    for l, (w_ih, w_hh, b) in enumerate(lstm_weights):
        if l == 0:
            slabs += [w_ih[:E].astype(bf), w_ih[E:].astype(bf), w_hh.astype(bf)]
        else:
            slabs += [w_ih.astype(bf), w_hh.astype(bf)]
        biases.append(b.astype(jnp.float32))
    w_pe_T = jnp.transpose(w_proj_enc).astype(bf)    # (H, 2EncH): h @ w_pe_T == W_pe h
    w_comb_h = w_combine[:H].astype(bf)              # rows acting on hidden
    w_comb_c = w_combine[H:].astype(bf)              # rows acting on context
    weight_args = slabs + biases + [w_pe_T, w_comb_h, w_comb_c]
    w_bytes = sum(int(w.size) * w.dtype.itemsize for w in weight_args)

    tgt_bf = tgt_emb.astype(bf)
    src_bf = src_enc.astype(bf)

    # ---- Chunk sizes from resident-VMEM arithmetic ---------------------------
    # T-chunking bounds the (Tc,Bc,E) + (Tc,Bc,H) residency for long sequences;
    # state carries across chunks in VMEM scratch.
    Tc = _pick_divisor(T, 128)

    def resident_bytes(bc):
        return (2 * (Tc * bc * E + bc * S * E2 + Tc * bc * H) * 2   # bf16 I/O, dbl-buffered
                + 2 * 2 * bc * H * 4                                # h0 / c0 (f32)
                + 3 * bc * H * 4                                    # h/c/ctx scratch
                + 2 * w_bytes)                                      # weights

    # Largest batch chunk fitting a conservative budget (sized for v7x's 64 MiB
    # VMEM); single-TC v5e/v6e can afford the whole batch.
    # TODO(synk): on v7x prefer Bc = B // 2 (multiple of 8) even when B fits, so
    # the "parallel" batch axis shards across both TensorCores.
    VMEM_BUDGET = 24 << 20
    Bc = B
    while Bc > 8 and Bc % 2 == 0 and resident_bytes(Bc) > VMEM_BUDGET:
        Bc //= 2
    nb, nt = B // Bc, T // Tc

    # Constant-index weight specs: single-buffer them once the grid actually
    # pipelines (>1 step) -- halves their VMEM footprint (matters most on v7x).
    single_buffer = (nb * nt) > 1

    def w_spec(shape):
        if single_buffer:
            return pl.BlockSpec(shape, lambda i, j: (0, 0),
                                pipeline_mode=pl.Buffered(1))
        return pl.BlockSpec(shape, lambda i, j: (0, 0))

    in_specs = [
        pl.BlockSpec((Tc, Bc, E), lambda i, j: (j, i, 0)),   # tgt embeddings (bf16)
        pl.BlockSpec((Bc, S, E2), lambda i, j: (i, 0, 0)),   # src encodings (bf16)
        pl.BlockSpec((Bc, H), lambda i, j: (i, 0)),          # h0 (f32)
        pl.BlockSpec((Bc, H), lambda i, j: (i, 0)),          # c0 (f32)
    ]
    in_specs += [w_spec(w.shape) for w in weight_args]

    grid_spec = pltpu.PrefetchScalarGridSpec(
        num_scalar_prefetch=0,
        grid=(nb, nt),
        in_specs=in_specs,
        # NOTE: real configs should keep H a multiple of 128 (lane-dense stores).
        out_specs=pl.BlockSpec((Tc, Bc, H), lambda i, j: (j, i, 0)),
        scratch_shapes=[pltpu.VMEM((Bc, H), jnp.float32),    # h carry
                        pltpu.VMEM((Bc, H), jnp.float32),    # c carry
                        pltpu.VMEM((Bc, H), jnp.float32)])   # prev_context carry

    av_all = pl.pallas_call(
        make_decoder_core_kernel(n_layers),
        out_shape=jax.ShapeDtypeStruct((T, B, H), bf),
        grid_spec=grid_spec,
        compiler_params=pltpu.CompilerParams(
            dimension_semantics=("parallel", "arbitrary"),
            vmem_limit_bytes=_vmem_limit(resident_bytes(Bc))),
    )(tgt_bf, src_bf, h0, c0, *weight_args)

    # ---- Kernel 2: vocab projection hoisted out of the recurrence ------------
    scores2d = vocab_projection(av_all.reshape(T * B, H), w_out.astype(bf))
    return scores2d.reshape(T, B, V)


# --------------------------------------------------------------------------- #
# Pure-JAX reference (Decoder.forward semantics, eval mode).  Mirrors the
# kernels' bf16-operand / f32-accumulate matmuls so the comparison isolates
# implementation correctness from the (review-requested) precision choice.
# --------------------------------------------------------------------------- #
def reference_forward(tgt_emb, src_enc, h0, c0, lstm_weights, w_proj_enc,
                      w_combine, w_out):
    bf = jnp.bfloat16

    def mm(a, w):
        return jnp.dot(a.astype(bf), w.astype(bf),
                       preferred_element_type=jnp.float32)

    T, B, E = tgt_emb.shape
    H = h0.shape[1]
    h, c = h0, c0
    ctx = jnp.zeros((B, H), jnp.float32)
    scores = []
    for t in range(T):
        word = tgt_emb[t]
        x = None
        for l, (w_ih, w_hh, b) in enumerate(lstm_weights):
            if l == 0:
                gates = mm(word, w_ih[:E]) + mm(ctx, w_ih[E:]) + mm(h, w_hh) + b
            else:
                gates = mm(x, w_ih) + mm(h, w_hh) + b
            i_g = jax.nn.sigmoid(gates[:, 0:H])
            f_g = jax.nn.sigmoid(gates[:, H:2 * H])
            g_g = jnp.tanh(gates[:, 2 * H:3 * H])
            o_g = jax.nn.sigmoid(gates[:, 3 * H:4 * H])
            c = f_g * c + i_g * g_g
            h = o_g * jnp.tanh(c)
            x = h
        hp = mm(h, w_proj_enc.T)                         # == proj_encoder applied to h side
        e = jnp.einsum('be,bse->bs', hp.astype(bf), src_enc.astype(bf),
                       preferred_element_type=jnp.float32)
        alpha = jax.nn.softmax(e, axis=-1)
        context = jnp.einsum('bs,bse->be', alpha.astype(bf), src_enc.astype(bf),
                             preferred_element_type=jnp.float32)
        av = jnp.tanh(mm(h, w_combine[:H]) + mm(context, w_combine[H:]))
        ctx = av
        scores.append(mm(av, w_out))
    return jnp.stack(scores, axis=0)


# --------------------------------------------------------------------------- #
if __name__ == "__main__":
    # Small deterministic config.
    B, S, T = 2, 8, 5                 # batch, src_len, tgt_len
    ENC_H = 16                        # encoder_hidden_size  -> 2*ENC_H = 32
    H = 32                            # decoder_hidden_size
    E = 32                            # decoder_embed_size
    V = 64                            # vocab size (index 0 = <pad>)
    N_LAYERS = 2

    key = jax.random.PRNGKey(0)
    ks = list(jax.random.split(key, 20))

    def u(k, shape, scale=0.1):
        return (jax.random.uniform(k, shape, jnp.float32) - 0.5) * 2.0 * scale

    # Parameters (synthetic init; weights stored pre-transposed for x @ W).
    embedding = u(ks[0], (V, E), 0.5).at[0].set(0.0)           # padding_idx=0 row zeroed
    w_init = u(ks[1], (2 * ENC_H, H))                          # init_cell weight^T
    b_init = u(ks[2], (H,))
    w_proj_enc = u(ks[3], (2 * ENC_H, H))                      # attention.proj_encoder^T
    w_combine = u(ks[4], (H + 2 * ENC_H, H))                   # attention.combine^T
    w_out = u(ks[5], (H, V))                                   # output^T

    lstm_weights = []
    for l in range(N_LAYERS):
        in_l = E + H if l == 0 else H
        w_ih = u(ks[6 + 3 * l], (in_l, 4 * H))
        w_hh = u(ks[7 + 3 * l], (H, 4 * H))
        b = u(ks[8 + 3 * l], (1, 4 * H))                       # b_ih + b_hh folded
        lstm_weights.append((w_ih, w_hh, b))

    # Inputs.
    src_encodings_sbd = u(ks[15], (S, B, 2 * ENC_H), 1.0)      # (src_len, batch, 2*EncH)
    encoder_cell = u(ks[16], (2, B, ENC_H), 1.0)               # fwd/bwd final cells
    tgt_tensor = jax.random.randint(ks[17], (T, B), 0, V)      # (tgt_len, batch) token ids

    # Glue (matches Decoder.forward / init_state semantics).
    src_enc = jnp.transpose(src_encodings_sbd, (1, 0, 2))      # (B, S, 2*EncH)
    tgt_emb = jnp.take(embedding, tgt_tensor, axis=0)          # (T, B, E)
    init_cell = (jnp.concatenate([encoder_cell[0], encoder_cell[1]], axis=1)
                 @ w_init + b_init)
    h0, c0 = jnp.tanh(init_cell), init_cell                    # decoder_init_state

    out = decoder_forward_pallas(tgt_emb, src_enc, h0, c0, lstm_weights,
                                 w_proj_enc, w_combine, w_out)
    out = jax.block_until_ready(out)

    ref = reference_forward(tgt_emb, src_enc, h0, c0, lstm_weights,
                            w_proj_enc, w_combine, w_out)
    assert out.shape == (T, B, V)
    assert jnp.allclose(out, ref, atol=2e-2, rtol=2e-2), "mismatch vs JAX reference"

    print("KERNEL_OK")
</pallas_src>

<mosaic_0001>
module attributes {stable_mosaic.version = 11 : i64} {
  func.func @kernel(%arg0: i32, %arg1: i32, %arg2: memref<5x2x32xbf16, #tpu.memory_space<vmem>>, %arg3: memref<2x8x32xbf16, #tpu.memory_space<vmem>>, %arg4: memref<2x32xf32, #tpu.memory_space<vmem>>, %arg5: memref<2x32xf32, #tpu.memory_space<vmem>>, %arg6: memref<32x128xbf16, #tpu.memory_space<vmem>>, %arg7: memref<32x128xbf16, #tpu.memory_space<vmem>>, %arg8: memref<32x128xbf16, #tpu.memory_space<vmem>>, %arg9: memref<32x128xbf16, #tpu.memory_space<vmem>>, %arg10: memref<32x128xbf16, #tpu.memory_space<vmem>>, %arg11: memref<1x128xf32, #tpu.memory_space<vmem>>, %arg12: memref<1x128xf32, #tpu.memory_space<vmem>>, %arg13: memref<32x32xbf16, #tpu.memory_space<vmem>>, %arg14: memref<32x32xbf16, #tpu.memory_space<vmem>>, %arg15: memref<32x32xbf16, #tpu.memory_space<vmem>>, %arg16: memref<5x2x32xbf16, #tpu.memory_space<vmem>>, %arg17: memref<2x32xf32, #tpu.memory_space<vmem>>, %arg18: memref<2x32xf32, #tpu.memory_space<vmem>>, %arg19: memref<2x32xf32, #tpu.memory_space<vmem>>) attributes {dimension_semantics = [#tpu.dimension_semantics<parallel>, #tpu.dimension_semantics<arbitrary>], iteration_bounds = array<i64: 1, 1>, scalar_prefetch = 0 : i64, scratch_operands = 3 : i64, tpu.core_type = #tpu.core_type<tc>, window_params = [{transform_indices = @transform_0, window_bounds = array<i64: 5, 2, 32>}, {transform_indices = @transform_1, window_bounds = array<i64: 2, 8, 32>}, {transform_indices = @transform_2, window_bounds = array<i64: 2, 32>}, {transform_indices = @transform_3, window_bounds = array<i64: 2, 32>}, {pipeline_mode = #tpu.pipeline_mode<synchronous>, transform_indices = @transform_4, window_bounds = array<i64: 32, 128>}, {pipeline_mode = #tpu.pipeline_mode<synchronous>, transform_indices = @transform_5, window_bounds = array<i64: 32, 128>}, {pipeline_mode = #tpu.pipeline_mode<synchronous>, transform_indices = @transform_6, window_bounds = array<i64: 32, 128>}, {pipeline_mode = #tpu.pipeline_mode<synchronous>, transform_indices = @transform_7, window_bounds = array<i64: 32, 128>}, {pipeline_mode = #tpu.pipeline_mode<synchronous>, transform_indices = @transform_8, window_bounds = array<i64: 32, 128>}, {pipeline_mode = #tpu.pipeline_mode<synchronous>, transform_indices = @transform_9, window_bounds = array<i64: 1, 128>}, {pipeline_mode = #tpu.pipeline_mode<synchronous>, transform_indices = @transform_10, window_bounds = array<i64: 1, 128>}, {pipeline_mode = #tpu.pipeline_mode<synchronous>, transform_indices = @transform_11, window_bounds = array<i64: 32, 32>}, {pipeline_mode = #tpu.pipeline_mode<synchronous>, transform_indices = @transform_12, window_bounds = array<i64: 32, 32>}, {pipeline_mode = #tpu.pipeline_mode<synchronous>, transform_indices = @transform_13, window_bounds = array<i64: 32, 32>}, {transform_indices = @transform_14, window_bounds = array<i64: 5, 2, 32>}]} {
    %c0_i32 = arith.constant 0 : i32
    %0 = arith.cmpi eq, %arg1, %c0_i32 : i32
    %1 = arith.extui %0 : i1 to i32
    %c0_i32_0 = arith.constant 0 : i32
    %2 = arith.cmpi ne, %1, %c0_i32_0 : i32
    scf.if %2 {
      %c0_18 = arith.constant 0 : index
      %c0_19 = arith.constant 0 : index
      %17 = vector.load %arg4[%c0_18, %c0_19] : memref<2x32xf32, #tpu.memory_space<vmem>>, vector<2x32xf32>
      %c0_20 = arith.constant 0 : index
      %c0_21 = arith.constant 0 : index
      %18 = vector.load %arg17[%c0_20, %c0_21] : memref<2x32xf32, #tpu.memory_space<vmem>>, vector<2x32xf32>
      tpu.vector_store %arg17[%c0_20, %c0_21], %17 {strides = array<i32>} : memref<2x32xf32, #tpu.memory_space<vmem>>, vector<2x32xf32>,
      %c0_22 = arith.constant 0 : index
      %c0_23 = arith.constant 0 : index
      %19 = vector.load %arg5[%c0_22, %c0_23] : memref<2x32xf32, #tpu.memory_space<vmem>>, vector<2x32xf32>
      %c0_24 = arith.constant 0 : index
      %c0_25 = arith.constant 0 : index
      %20 = vector.load %arg18[%c0_24, %c0_25] : memref<2x32xf32, #tpu.memory_space<vmem>>, vector<2x32xf32>
      tpu.vector_store %arg18[%c0_24, %c0_25], %19 {strides = array<i32>} : memref<2x32xf32, #tpu.memory_space<vmem>>, vector<2x32xf32>,
      %cst = arith.constant 0.000000e+00 : f32
      %21 = vector.broadcast %cst : f32 to vector<2x32xf32>
      %c0_26 = arith.constant 0 : index
      %c0_27 = arith.constant 0 : index
      %22 = vector.load %arg19[%c0_26, %c0_27] : memref<2x32xf32, #tpu.memory_space<vmem>>, vector<2x32xf32>
      tpu.vector_store %arg19[%c0_26, %c0_27], %21 {strides = array<i32>} : memref<2x32xf32, #tpu.memory_space<vmem>>, vector<2x32xf32>,
    } else {
    }
    %c0 = arith.constant 0 : index
    %c0_1 = arith.constant 0 : index
    %3 = vector.load %arg11[%c0, %c0_1] : memref<1x128xf32, #tpu.memory_space<vmem>>, vector<1x128xf32>
    %4 = vector.shape_cast %3 : vector<1x128xf32> to vector<1x128xf32>
    %5 = vector.broadcast %4 : vector<1x128xf32> to vector<2x128xf32>
    %c0_2 = arith.constant 0 : index
    %c0_3 = arith.constant 0 : index
    %6 = vector.load %arg12[%c0_2, %c0_3] : memref<1x128xf32, #tpu.memory_space<vmem>>, vector<1x128xf32>
    %7 = vector.shape_cast %6 : vector<1x128xf32> to vector<1x128xf32>
    %8 = vector.broadcast %7 : vector<1x128xf32> to vector<2x128xf32>
    %c0_4 = arith.constant 0 : index
    %c0_5 = arith.constant 0 : index
    %9 = vector.load %arg17[%c0_4, %c0_5] : memref<2x32xf32, #tpu.memory_space<vmem>>, vector<2x32xf32>
    %c0_6 = arith.constant 0 : index
    %c0_7 = arith.constant 0 : index
    %10 = vector.load %arg18[%c0_6, %c0_7] : memref<2x32xf32, #tpu.memory_space<vmem>>, vector<2x32xf32>
    %c0_8 = arith.constant 0 : index
    %c0_9 = arith.constant 0 : index
    %11 = vector.load %arg19[%c0_8, %c0_9] : memref<2x32xf32, #tpu.memory_space<vmem>>, vector<2x32xf32>
    %c0_i32_10 = arith.constant 0 : i32
    %c5_i32 = arith.constant 5 : i32
    %12 = arith.addi %c0_i32_10, %c5_i32 : i32
    %c1_i32 = arith.constant 1 : i32
    %13:3 = scf.for %arg20 = %c0_i32_10 to %12 step %c1_i32 iter_args(%arg21 = %9, %arg22 = %10, %arg23 = %11) -> (vector<2x32xf32>, vector<2x32xf32>, vector<2x32xf32>)  : i32 {
      %17 = arith.index_cast %arg20 : i32 to index
      %c0_18 = arith.constant 0 : index
      %c0_19 = arith.constant 0 : index
      %18 = vector.load %arg2[%17, %c0_18, %c0_19] : memref<5x2x32xbf16, #tpu.memory_space<vmem>>, vector<1x2x32xbf16>
      %19 = vector.shape_cast %18 : vector<1x2x32xbf16> to vector<2x32xbf16>
      %20 = arith.truncf %arg21 : vector<2x32xf32> to vector<2x32xbf16>
      %c0_20 = arith.constant 0 : index
      %c0_21 = arith.constant 0 : index
      %21 = vector.load %arg6[%c0_20, %c0_21] : memref<32x128xbf16, #tpu.memory_space<vmem>>, vector<32x128xbf16>
      %cst = arith.constant dense<0.000000e+00> : vector<2x128xf32>
      %22 = tpu.matmul %19, %21, %cst {dimension_numbers = #tpu.dot_dimension_numbers<[1], [0], [0], [1], [0, 0, 1, 1], [], []>} : vector<2x32xbf16>, vector<32x128xbf16>, vector<2x128xf32> -> vector<2x128xf32>
      %23 = arith.truncf %arg23 : vector<2x32xf32> to vector<2x32xbf16>
      %c0_22 = arith.constant 0 : index
      %c0_23 = arith.constant 0 : index
      %24 = vector.load %arg7[%c0_22, %c0_23] : memref<32x128xbf16, #tpu.memory_space<vmem>>, vector<32x128xbf16>
      %cst_24 = arith.constant dense<0.000000e+00> : vector<2x128xf32>
      %25 = tpu.matmul %23, %24, %cst_24 {dimension_numbers = #tpu.dot_dimension_numbers<[1], [0], [0], [1], [0, 0, 1, 1], [], []>} : vector<2x32xbf16>, vector<32x128xbf16>, vector<2x128xf32> -> vector<2x128xf32>
      %26 = arith.addf %22, %25 : vector<2x128xf32>
      %c0_25 = arith.constant 0 : index
      %c0_26 = arith.constant 0 : index
      %27 = vector.load %arg8[%c0_25, %c0_26] : memref<32x128xbf16, #tpu.memory_space<vmem>>, vector<32x128xbf16>
      %cst_27 = arith.constant dense<0.000000e+00> : vector<2x128xf32>
      %28 = tpu.matmul %20, %27, %cst_27 {dimension_numbers = #tpu.dot_dimension_numbers<[1], [0], [0], [1], [0, 0, 1, 1], [], []>} : vector<2x32xbf16>, vector<32x128xbf16>, vector<2x128xf32> -> vector<2x128xf32>
      %29 = arith.addf %26, %28 : vector<2x128xf32>
      %30 = arith.addf %29, %5 : vector<2x128xf32>
      %31 = vector.extract_strided_slice %30 {offsets = [0, 0], sizes = [2, 32], strides = [1, 1]} : vector<2x128xf32> to vector<2x32xf32>
      %32 = arith.negf %31 : vector<2x32xf32>
      %33 = math.exp %32 : vector<2x32xf32>
      %cst_28 = arith.constant 1.000000e+00 : f32
      %34 = vector.broadcast %cst_28 : f32 to vector<2x32xf32>
      %35 = arith.addf %34, %33 : vector<2x32xf32>
      %36 = arith.divf %34, %35 : vector<2x32xf32>
      %37 = vector.extract_strided_slice %30 {offsets = [0, 32], sizes = [2, 32], strides = [1, 1]} : vector<2x128xf32> to vector<2x32xf32>
      %38 = arith.negf %37 : vector<2x32xf32>
      %39 = math.exp %38 : vector<2x32xf32>
      %cst_29 = arith.constant 1.000000e+00 : f32
      %40 = vector.broadcast %cst_29 : f32 to vector<2x32xf32>
      %41 = arith.addf %40, %39 : vector<2x32xf32>
      %42 = arith.divf %40, %41 : vector<2x32xf32>
      %43 = vector.extract_strided_slice %30 {offsets = [0, 64], sizes = [2, 32], strides = [1, 1]} : vector<2x128xf32> to vector<2x32xf32>
      %44 = math.tanh %43 : vector<2x32xf32>
      %45 = vector.extract_strided_slice %30 {offsets = [0, 96], sizes = [2, 32], strides = [1, 1]} : vector<2x128xf32> to vector<2x32xf32>
      %46 = arith.negf %45 : vector<2x32xf32>
      %47 = math.exp %46 : vector<2x32xf32>
      %cst_30 = arith.constant 1.000000e+00 : f32
      %48 = vector.broadcast %cst_30 : f32 to vector<2x32xf32>
      %49 = arith.addf %48, %47 : vector<2x32xf32>
      %50 = arith.divf %48, %49 : vector<2x32xf32>
      %51 = arith.mulf %42, %arg22 : vector<2x32xf32>
      %52 = arith.mulf %36, %44 : vector<2x32xf32>
      %53 = arith.addf %51, %52 : vector<2x32xf32>
      %54 = math.tanh %53 : vector<2x32xf32>
      %55 = arith.mulf %50, %54 : vector<2x32xf32>
      %56 = arith.truncf %55 : vector<2x32xf32> to vector<2x32xbf16>
      %c0_31 = arith.constant 0 : index
      %c0_32 = arith.constant 0 : index
      %57 = vector.load %arg9[%c0_31, %c0_32] : memref<32x128xbf16, #tpu.memory_space<vmem>>, vector<32x128xbf16>
      %cst_33 = arith.constant dense<0.000000e+00> : vector<2x128xf32>
      %58 = tpu.matmul %56, %57, %cst_33 {dimension_numbers = #tpu.dot_dimension_numbers<[1], [0], [0], [1], [0, 0, 1, 1], [], []>} : vector<2x32xbf16>, vector<32x128xbf16>, vector<2x128xf32> -> vector<2x128xf32>
      %c0_34 = arith.constant 0 : index
      %c0_35 = arith.constant 0 : index
      %59 = vector.load %arg10[%c0_34, %c0_35] : memref<32x128xbf16, #tpu.memory_space<vmem>>, vector<32x128xbf16>
      %cst_36 = arith.constant dense<0.000000e+00> : vector<2x128xf32>
      %60 = tpu.matmul %56, %59, %cst_36 {dimension_numbers = #tpu.dot_dimension_numbers<[1], [0], [0], [1], [0, 0, 1, 1], [], []>} : vector<2x32xbf16>, vector<32x128xbf16>, vector<2x128xf32> -> vector<2x128xf32>
      %61 = arith.addf %58, %60 : vector<2x128xf32>
      %62 = arith.addf %61, %8 : vector<2x128xf32>
      %63 = vector.extract_strided_slice %62 {offsets = [0, 0], sizes = [2, 32], strides = [1, 1]} : vector<2x128xf32> to vector<2x32xf32>
      %64 = arith.negf %63 : vector<2x32xf32>
      %65 = math.exp %64 : vector<2x32xf32>
      %cst_37 = arith.constant 1.000000e+00 : f32
      %66 = vector.broadcast %cst_37 : f32 to vector<2x32xf32>
      %67 = arith.addf %66, %65 : vector<2x32xf32>
      %68 = arith.divf %66, %67 : vector<2x32xf32>
      %69 = vector.extract_strided_slice %62 {offsets = [0, 32], sizes = [2, 32], strides = [1, 1]} : vector<2x128xf32> to vector<2x32xf32>
      %70 = arith.negf %69 : vector<2x32xf32>
      %71 = math.exp %70 : vector<2x32xf32>
      %cst_38 = arith.constant 1.000000e+00 : f32
      %72 = vector.broadcast %cst_38 : f32 to vector<2x32xf32>
      %73 = arith.addf %72, %71 : vector<2x32xf32>
      %74 = arith.divf %72, %73 : vector<2x32xf32>
      %75 = vector.extract_strided_slice %62 {offsets = [0, 64], sizes = [2, 32], strides = [1, 1]} : vector<2x128xf32> to vector<2x32xf32>
      %76 = math.tanh %75 : vector<2x32xf32>
      %77 = vector.extract_strided_slice %62 {offsets = [0, 96], sizes = [2, 32], strides = [1, 1]} : vector<2x128xf32> to vector<2x32xf32>
      %78 = arith.negf %77 : vector<2x32xf32>
      %79 = math.exp %78 : vector<2x32xf32>
      %cst_39 = arith.constant 1.000000e+00 : f32
      %80 = vector.broadcast %cst_39 : f32 to vector<2x32xf32>
      %81 = arith.addf %80, %79 : vector<2x32xf32>
      %82 = arith.divf %80, %81 : vector<2x32xf32>
      %83 = arith.mulf %74, %53 : vector<2x32xf32>
      %84 = arith.mulf %68, %76 : vector<2x32xf32>
      %85 = arith.addf %83, %84 : vector<2x32xf32>
      %86 = math.tanh %85 : vector<2x32xf32>
      %87 = arith.mulf %82, %86 : vector<2x32xf32>
      %88 = arith.truncf %87 : vector<2x32xf32> to vector<2x32xbf16>
      %c0_40 = arith.constant 0 : index
      %c0_41 = arith.constant 0 : index
      %89 = vector.load %arg13[%c0_40, %c0_41] : memref<32x32xbf16, #tpu.memory_space<vmem>>, vector<32x32xbf16>
      %cst_42 = arith.constant dense<0.000000e+00> : vector<2x32xf32>
      %90 = tpu.matmul %88, %89, %cst_42 {dimension_numbers = #tpu.dot_dimension_numbers<[1], [0], [0], [1], [0, 0, 1, 1], [], []>} : vector<2x32xbf16>, vector<32x32xbf16>, vector<2x32xf32> -> vector<2x32xf32>
      %91 = vector.shape_cast %90 : vector<2x32xf32> to vector<2x1x32xf32>
      %92 = arith.truncf %91 : vector<2x1x32xf32> to vector<2x1x32xbf16>
      %c0_43 = arith.constant 0 : index
      %c0_44 = arith.constant 0 : index
      %c0_45 = arith.constant 0 : index
      %93 = vector.load %arg3[%c0_43, %c0_44, %c0_45] : memref<2x8x32xbf16, #tpu.memory_space<vmem>>, vector<2x8x32xbf16>
      "tpu.trace_start"() <{level = 10 : i32, message = "bqe,bse->bqs"}> : () -> ()
      %cst_46 = arith.constant dense<0.000000e+00> : vector<2x1x8xf32>
      %94 = tpu.matmul %92, %93, %cst_46 {dimension_numbers = #tpu.dot_dimension_numbers<[2], [2], [1], [1], [0, 0, 0, 1, 1, 1], [0], [0]>} : vector<2x1x32xbf16>, vector<2x8x32xbf16>, vector<2x1x8xf32> -> vector<2x1x8xf32>
      "tpu.trace_stop"() : () -> ()
      %cst_47 = arith.constant dense<0xFF800000> : vector<2x1xf32>
      %95 = vector.multi_reduction <maximumf>, %94, %cst_47 [2] : vector<2x1x8xf32> to vector<2x1xf32>
      %96 = vector.shape_cast %95 : vector<2x1xf32> to vector<2x1x1xf32>
      %97 = vector.broadcast %96 : vector<2x1x1xf32> to vector<2x1x8xf32>
      %98 = arith.subf %94, %97 : vector<2x1x8xf32>
      %99 = math.exp %98 : vector<2x1x8xf32>
      %cst_48 = arith.constant dense<0.000000e+00> : vector<2x1xf32>
      %100 = vector.multi_reduction <add>, %99, %cst_48 [2] : vector<2x1x8xf32> to vector<2x1xf32>
      %101 = vector.shape_cast %100 : vector<2x1xf32> to vector<2x1x1xf32>
      %102 = tpu.reciprocal %101 {approx = true} : vector<2x1x1xf32> -> vector<2x1x1xf32>
      %103 = vector.broadcast %102 : vector<2x1x1xf32> to vector<2x1x8xf32>
      %104 = arith.mulf %99, %103 : vector<2x1x8xf32>
      %105 = arith.truncf %104 : vector<2x1x8xf32> to vector<2x1x8xbf16>
      %c0_49 = arith.constant 0 : index
      %c0_50 = arith.constant 0 : index
      %c0_51 = arith.constant 0 : index
      %106 = vector.load %arg3[%c0_49, %c0_50, %c0_51] : memref<2x8x32xbf16, #tpu.memory_space<vmem>>, vector<2x8x32xbf16>
      "tpu.trace_start"() <{level = 10 : i32, message = "bqs,bse->bqe"}> : () -> ()
      %cst_52 = arith.constant dense<0.000000e+00> : vector<2x1x32xf32>
      %107 = tpu.matmul %105, %106, %cst_52 {dimension_numbers = #tpu.dot_dimension_numbers<[2], [1], [1], [2], [0, 0, 0, 1, 1, 2], [0], [0]>} : vector<2x1x8xbf16>, vector<2x8x32xbf16>, vector<2x1x32xf32> -> vector<2x1x32xf32>
      "tpu.trace_stop"() : () -> ()
      %108 = vector.shape_cast %107 : vector<2x1x32xf32> to vector<2x32xf32>
      %c0_53 = arith.constant 0 : index
      %c0_54 = arith.constant 0 : index
      %109 = vector.load %arg14[%c0_53, %c0_54] : memref<32x32xbf16, #tpu.memory_space<vmem>>, vector<32x32xbf16>
      %cst_55 = arith.constant dense<0.000000e+00> : vector<2x32xf32>
      %110 = tpu.matmul %88, %109, %cst_55 {dimension_numbers = #tpu.dot_dimension_numbers<[1], [0], [0], [1], [0, 0, 1, 1], [], []>} : vector<2x32xbf16>, vector<32x32xbf16>, vector<2x32xf32> -> vector<2x32xf32>
      %111 = arith.truncf %108 : vector<2x32xf32> to vector<2x32xbf16>
      %c0_56 = arith.constant 0 : index
      %c0_57 = arith.constant 0 : index
      %112 = vector.load %arg15[%c0_56, %c0_57] : memref<32x32xbf16, #tpu.memory_space<vmem>>, vector<32x32xbf16>
      %cst_58 = arith.constant dense<0.000000e+00> : vector<2x32xf32>
      %113 = tpu.matmul %111, %112, %cst_58 {dimension_numbers = #tpu.dot_dimension_numbers<[1], [0], [0], [1], [0, 0, 1, 1], [], []>} : vector<2x32xbf16>, vector<32x32xbf16>, vector<2x32xf32> -> vector<2x32xf32>
      %114 = arith.addf %110, %113 : vector<2x32xf32>
      %115 = math.tanh %114 : vector<2x32xf32>
      %116 = arith.truncf %115 : vector<2x32xf32> to vector<2x32xbf16>
      %117 = arith.index_cast %arg20 : i32 to index
      %c0_59 = arith.constant 0 : index
      %c0_60 = arith.constant 0 : index
      %118 = vector.load %arg16[%117, %c0_59, %c0_60] : memref<5x2x32xbf16, #tpu.memory_space<vmem>>, vector<1x2x32xbf16>
      %119 = vector.shape_cast %118 : vector<1x2x32xbf16> to vector<2x32xbf16>
      %120 = vector.shape_cast %116 : vector<2x32xbf16> to vector<1x2x32xbf16>
      tpu.vector_store %arg16[%117, %c0_59, %c0_60], %120 {strides = array<i32>} : memref<5x2x32xbf16, #tpu.memory_space<vmem>>, vector<1x2x32xbf16>,
      scf.yield %87, %85, %115 : vector<2x32xf32>, vector<2x32xf32>, vector<2x32xf32>
    }
    %c5_i32_11 = arith.constant 5 : i32
    %c0_12 = arith.constant 0 : index
    %c0_13 = arith.constant 0 : index
    %14 = vector.load %arg17[%c0_12, %c0_13] : memref<2x32xf32, #tpu.memory_space<vmem>>, vector<2x32xf32>
    tpu.vector_store %arg17[%c0_12, %c0_13], %13#0 {strides = array<i32>} : memref<2x32xf32, #tpu.memory_space<vmem>>, vector<2x32xf32>,
    %c0_14 = arith.constant 0 : index
    %c0_15 = arith.constant 0 : index
    %15 = vector.load %arg18[%c0_14, %c0_15] : memref<2x32xf32, #tpu.memory_space<vmem>>, vector<2x32xf32>
    tpu.vector_store %arg18[%c0_14, %c0_15], %13#1 {strides = array<i32>} : memref<2x32xf32, #tpu.memory_space<vmem>>, vector<2x32xf32>,
    %c0_16 = arith.constant 0 : index
    %c0_17 = arith.constant 0 : index
    %16 = vector.load %arg19[%c0_16, %c0_17] : memref<2x32xf32, #tpu.memory_space<vmem>>, vector<2x32xf32>
    tpu.vector_store %arg19[%c0_16, %c0_17], %13#2 {strides = array<i32>} : memref<2x32xf32, #tpu.memory_space<vmem>>, vector<2x32xf32>,
    return
  }
  func.func @transform_0(%arg0: i32, %arg1: i32) -> (i32, i32, i32) {
    %c0_i32 = arith.constant 0 : i32
    %c0_i32_0 = arith.constant 0 : i32
    return %arg1, %arg0, %c0_i32 : i32, i32, i32
  }
  func.func @transform_1(%arg0: i32, %arg1: i32) -> (i32, i32, i32) {
    %c0_i32 = arith.constant 0 : i32
    %c0_i32_0 = arith.constant 0 : i32
    %c0_i32_1 = arith.constant 0 : i32
    return %arg0, %c0_i32, %c0_i32_0 : i32, i32, i32
  }
  func.func @transform_2(%arg0: i32, %arg1: i32) -> (i32, i32) {
    %c0_i32 = arith.constant 0 : i32
    %c0_i32_0 = arith.constant 0 : i32
    return %arg0, %c0_i32 : i32, i32
  }
  func.func @transform_3(%arg0: i32, %arg1: i32) -> (i32, i32) {
    %c0_i32 = arith.constant 0 : i32
    %c0_i32_0 = arith.constant 0 : i32
    return %arg0, %c0_i32 : i32, i32
  }
  func.func @transform_4(%arg0: i32, %arg1: i32) -> (i32, i32) {
    %c0_i32 = arith.constant 0 : i32
    %c0_i32_0 = arith.constant 0 : i32
    %c0_i32_1 = arith.constant 0 : i32
    return %c0_i32, %c0_i32_0 : i32, i32
  }
  func.func @transform_5(%arg0: i32, %arg1: i32) -> (i32, i32) {
    %c0_i32 = arith.constant 0 : i32
    %c0_i32_0 = arith.constant 0 : i32
    %c0_i32_1 = arith.constant 0 : i32
    return %c0_i32, %c0_i32_0 : i32, i32
  }
  func.func @transform_6(%arg0: i32, %arg1: i32) -> (i32, i32) {
    %c0_i32 = arith.constant 0 : i32
    %c0_i32_0 = arith.constant 0 : i32
    %c0_i32_1 = arith.constant 0 : i32
    return %c0_i32, %c0_i32_0 : i32, i32
  }
  func.func @transform_7(%arg0: i32, %arg1: i32) -> (i32, i32) {
    %c0_i32 = arith.constant 0 : i32
    %c0_i32_0 = arith.constant 0 : i32
    %c0_i32_1 = arith.constant 0 : i32
    return %c0_i32, %c0_i32_0 : i32, i32
  }
  func.func @transform_8(%arg0: i32, %arg1: i32) -> (i32, i32) {
    %c0_i32 = arith.constant 0 : i32
    %c0_i32_0 = arith.constant 0 : i32
    %c0_i32_1 = arith.constant 0 : i32
    return %c0_i32, %c0_i32_0 : i32, i32
  }
  func.func @transform_9(%arg0: i32, %arg1: i32) -> (i32, i32) {
    %c0_i32 = arith.constant 0 : i32
    %c0_i32_0 = arith.constant 0 : i32
    %c0_i32_1 = arith.constant 0 : i32
    return %c0_i32, %c0_i32_0 : i32, i32
  }
  func.func @transform_10(%arg0: i32, %arg1: i32) -> (i32, i32) {
    %c0_i32 = arith.constant 0 : i32
    %c0_i32_0 = arith.constant 0 : i32
    %c0_i32_1 = arith.constant 0 : i32
    return %c0_i32, %c0_i32_0 : i32, i32
  }
  func.func @transform_11(%arg0: i32, %arg1: i32) -> (i32, i32) {
    %c0_i32 = arith.constant 0 : i32
    %c0_i32_0 = arith.constant 0 : i32
    %c0_i32_1 = arith.constant 0 : i32
    return %c0_i32, %c0_i32_0 : i32, i32
  }
  func.func @transform_12(%arg0: i32, %arg1: i32) -> (i32, i32) {
    %c0_i32 = arith.constant 0 : i32
    %c0_i32_0 = arith.constant 0 : i32
    %c0_i32_1 = arith.constant 0 : i32
    return %c0_i32, %c0_i32_0 : i32, i32
  }
  func.func @transform_13(%arg0: i32, %arg1: i32) -> (i32, i32) {
    %c0_i32 = arith.constant 0 : i32
    %c0_i32_0 = arith.constant 0 : i32
    %c0_i32_1 = arith.constant 0 : i32
    return %c0_i32, %c0_i32_0 : i32, i32
  }
  func.func @transform_14(%arg0: i32, %arg1: i32) -> (i32, i32, i32) {
    %c0_i32 = arith.constant 0 : i32
    %c0_i32_0 = arith.constant 0 : i32
    return %arg1, %arg0, %c0_i32 : i32, i32, i32
  }
}

</mosaic_0001>

<llo_original>
// kernel: tpu_custom_call.1
$region0: #{tpu_custom_call.1}
  #allocation0 [shape = 'u32[]', space=smem, size = 0x4, offset = 0x4, fixed_abs, tag = 'smem constant byte address 0x4 - core index']
  #allocation1 [shape = 'u32[144,128]{1,0:T(1,128)}', space=vmem, size = 0x12000, scoped, tag = 'internal scratch']
  #allocation2 [shape = 'f32[2,32]{1,0:T(2,128)}', space=vmem, size = 0x400, scoped, tag = 'scratch operand']
  #allocation3 [shape = 'f32[2,32]{1,0:T(2,128)}', space=vmem, size = 0x400, scoped, tag = 'scratch operand']
  #allocation4 [shape = 'f32[2,32]{1,0:T(2,128)}', space=vmem, size = 0x400, scoped, tag = 'scratch operand']
  %s0 = inlined_call_operand.hbm [shape: bf16[5,2,32], index: 0, kind: input, shape index: {}]
  %s1 = inlined_call_operand.hbm [shape: bf16[2,8,32], index: 1, kind: input, shape index: {}]
  %s2 = inlined_call_operand.hbm [shape: f32[2,32], index: 2, kind: input, shape index: {}]
  %s3 = inlined_call_operand.hbm [shape: f32[2,32], index: 3, kind: input, shape index: {}]
  %s4 = inlined_call_operand.hbm [shape: bf16[32,128], index: 4, kind: input, shape index: {}]
  %s5 = inlined_call_operand.vmem [shape: bf16[32,128], index: 5, kind: input, shape index: {}]
  %s6 = inlined_call_operand.hbm [shape: bf16[32,128], index: 6, kind: input, shape index: {}]
  %s7 = inlined_call_operand.hbm [shape: bf16[32,128], index: 7, kind: input, shape index: {}]
  %s8 = inlined_call_operand.hbm [shape: bf16[32,128], index: 8, kind: input, shape index: {}]
  %s9 = inlined_call_operand.vmem [shape: f32[1,128], index: 9, kind: input, shape index: {}]
  %s10 = inlined_call_operand.hbm [shape: f32[1,128], index: 10, kind: input, shape index: {}]
  %s11 = inlined_call_operand.vmem [shape: bf16[32,32], index: 11, kind: input, shape index: {}]
  %s12 = inlined_call_operand.hbm [shape: bf16[32,32], index: 12, kind: input, shape index: {}]
  %s13 = inlined_call_operand.vmem [shape: bf16[32,32], index: 13, kind: input, shape index: {}]
  %s14 = inlined_call_operand.hbm [shape: bf16[5,2,32], index: 14, kind: output, shape index: {}]
  %s15 = sld [smem:[#allocation0]]
  $region117: #{tpu_custom_call.1} parent=0
    _
  %s17 = ssub.s32 1, %s15
  %s18 = scalar_select 0, %s17, %s15
  $region1: #{tpu_custom_call.1} parent=0
    #allocation5 [shape = 'u8[2560]{0}', space=vmem, size = 0xc00, scoped, tag = 'input window, operand 0, single buffered']
    #allocation6 [shape = 's32[1]{0}', space=sflag, size = 0x4, scoped, tag = 'scoped memory for tpu_custom_call.1']
    #allocation7 [shape = 's32[1]{0}', space=sflag, size = 0x4, scoped, tag = 'scoped memory for tpu_custom_call.1']
    #allocation8 [shape = 'u8[4096]{0}', space=vmem, size = 0x1000, scoped, tag = 'input window, operand 1, single buffered']
    #allocation9 [shape = 's32[1]{0}', space=sflag, size = 0x4, scoped, tag = 'scoped memory for tpu_custom_call.1']
    #allocation10 [shape = 'u8[1024]{0}', space=vmem, size = 0x400, scoped, tag = 'input window, operand 2, single buffered']
    #allocation11 [shape = 'u8[1024]{0}', space=vmem, size = 0x400, scoped, tag = 'input window, operand 3, single buffered']
    #allocation12 [shape = 's32[1]{0}', space=sflag, size = 0x4, scoped, tag = 'scoped memory for tpu_custom_call.1']
    #allocation13 [shape = 'u8[8192]{0}', space=vmem, size = 0x2000, scoped, tag = 'input window, operand 4, single buffered']
    #allocation14 [shape = 'u8[8192]{0}', space=vmem, size = 0x2000, scoped, tag = 'input window, operand 6, single buffered']
    #allocation15 [shape = 's32[1]{0}', space=sflag, size = 0x4, scoped, tag = 'scoped memory for tpu_custom_call.1']
    #allocation16 [shape = 'u8[8192]{0}', space=vmem, size = 0x2000, scoped, tag = 'input window, operand 7, single buffered']
    #allocation17 [shape = 'u8[8192]{0}', space=vmem, size = 0x2000, scoped, tag = 'input window, operand 8, single buffered']
    #allocation18 [shape = 's32[1]{0}', space=sflag, size = 0x4, scoped, tag = 'scoped memory for tpu_custom_call.1']
    #allocation19 [shape = 'u8[512]{0}', space=vmem, size = 0x400, scoped, tag = 'input window, operand 10, single buffered']
    #allocation20 [shape = 'u8[8192]{0}', space=vmem, size = 0x2000, scoped, tag = 'input window, operand 12, single buffered']
    #allocation21 [shape = 's32[1]{0}', space=sflag, size = 0x4, scoped, tag = 'scoped memory for tpu_custom_call.1']
    #allocation22 [shape = 'u8[2560]{0}', space=vmem, size = 0xc00, scoped, tag = 'output window, operand 0, single buffered']
    %19 = vsyncpa [#allocation6], 0
    %20 = vsyncpa [#allocation9], 0
    %21 = vsyncpa [#allocation12], 0
    %22 = vsyncpa [#allocation15], 0
    %23 = vsyncpa [#allocation18], 0
    %24 = vsyncpa [#allocation21], 0
    %25 = vsyncpa [#allocation7], 0
    // Predicated region
    $region2: #{tpu_custom_call.1} parent=1 // pred_check
      _
    $region3: #{tpu_custom_call.1} parent=1 // pred_check_branch
      %27 = sbr.rel (0) target = $region5
    $region4: #{tpu_custom_call.1} parent=1 // pred_region
      %s29 = ssub.s32 80, 80
      %30 = vsyncadd [#allocation6], %s29
      %s31 = sshll.u32 [#allocation5], 4
      %s32 = int_to_ptr.vmem [resolvable:$true] %s31
      %37 = dma.hbm_to_vmem [thread:$0]  %s0, 80, %s32, [#allocation6], 16, 16, 1
    $region5: #{tpu_custom_call.1} parent=1 // pred_fallthru
      _
    // Predicated region
    $region6: #{tpu_custom_call.1} parent=1 // pred_check
      _
    $region7: #{tpu_custom_call.1} parent=1 // pred_check_branch
      %39 = sbr.rel (0) target = $region9
    $region8: #{tpu_custom_call.1} parent=1 // pred_region
      %s41 = ssub.s32 128, 128
      %42 = vsyncadd [#allocation9], %s41
      %s43 = sshll.u32 [#allocation8], 4
      %s44 = int_to_ptr.vmem [resolvable:$true] %s43
      %49 = dma.hbm_to_vmem [thread:$0]  %s1, 128, %s44, [#allocation9], 64, 64, 4
    $region9: #{tpu_custom_call.1} parent=1 // pred_fallthru
      _
    // Predicated region
    $region10: #{tpu_custom_call.1} parent=1 // pred_check
      _
    $region11: #{tpu_custom_call.1} parent=1 // pred_check_branch
      %51 = sbr.rel (0) target = $region13
    $region12: #{tpu_custom_call.1} parent=1 // pred_region
      %s53 = ssub.s32 32, 32
      %54 = vsyncadd [#allocation9], %s53
      %s56 = sshll.u32 [#allocation10], 4
      %s57 = int_to_ptr.vmem [resolvable:$true] %s56
      %59 = dma.hbm_to_vmem [thread:$0]  %s2, 32, %s57, [#allocation9]
    $region13: #{tpu_custom_call.1} parent=1 // pred_fallthru
      _
    // Predicated region
    $region14: #{tpu_custom_call.1} parent=1 // pred_check
      _
    $region15: #{tpu_custom_call.1} parent=1 // pred_check_branch
      %61 = sbr.rel (0) target = $region17
    $region16: #{tpu_custom_call.1} parent=1 // pred_region
      %s63 = ssub.s32 32, 32
      %64 = vsyncadd [#allocation12], %s63
      %s66 = sshll.u32 [#allocation11], 4
      %s67 = int_to_ptr.vmem [resolvable:$true] %s66
      %69 = dma.hbm_to_vmem [thread:$0]  %s3, 32, %s67, [#allocation12]
    $region17: #{tpu_custom_call.1} parent=1 // pred_fallthru
      _
    // Predicated region
    $region18: #{tpu_custom_call.1} parent=1 // pred_check
      _
    $region19: #{tpu_custom_call.1} parent=1 // pred_check_branch
      %71 = sbr.rel (0) target = $region21
    $region20: #{tpu_custom_call.1} parent=1 // pred_region
      %s73 = ssub.s32 256, 256
      %74 = vsyncadd [#allocation12], %s73
      %s75 = sshll.u32 [#allocation13], 4
      %s76 = int_to_ptr.vmem [resolvable:$true] %s75
      %81 = dma.hbm_to_vmem [thread:$0]  %s4, 256, %s76, [#allocation12], 64, 64, 4
    $region21: #{tpu_custom_call.1} parent=1 // pred_fallthru
      _
    // Predicated region
    $region22: #{tpu_custom_call.1} parent=1 // pred_check
      _
    $region23: #{tpu_custom_call.1} parent=1 // pred_check_branch
      %83 = sbr.rel (0) target = $region25
    $region24: #{tpu_custom_call.1} parent=1 // pred_region
      _
    $region25: #{tpu_custom_call.1} parent=1 // pred_fallthru
      _
    // Predicated region
    $region26: #{tpu_custom_call.1} parent=1 // pred_check
      _
    $region27: #{tpu_custom_call.1} parent=1 // pred_check_branch
      %85 = sbr.rel (0) target = $region29
    $region28: #{tpu_custom_call.1} parent=1 // pred_region
      %s87 = ssub.s32 256, 256
      %88 = vsyncadd [#allocation15], %s87
      %s89 = sshll.u32 [#allocation14], 4
      %s90 = int_to_ptr.vmem [resolvable:$true] %s89
      %95 = dma.hbm_to_vmem [thread:$0]  %s6, 256, %s90, [#allocation15], 64, 64, 4
    $region29: #{tpu_custom_call.1} parent=1 // pred_fallthru
      _
    // Predicated region
    $region30: #{tpu_custom_call.1} parent=1 // pred_check
      _
    $region31: #{tpu_custom_call.1} parent=1 // pred_check_branch
      %97 = sbr.rel (0) target = $region33
    $region32: #{tpu_custom_call.1} parent=1 // pred_region
      %s99 = ssub.s32 256, 256
      %100 = vsyncadd [#allocation15], %s99
      %s101 = sshll.u32 [#allocation16], 4
      %s102 = int_to_ptr.vmem [resolvable:$true] %s101
      %107 = dma.hbm_to_vmem [thread:$0]  %s7, 256, %s102, [#allocation15], 64, 64, 4
    $region33: #{tpu_custom_call.1} parent=1 // pred_fallthru
      _
    // Predicated region
    $region34: #{tpu_custom_call.1} parent=1 // pred_check
      _
    $region35: #{tpu_custom_call.1} parent=1 // pred_check_branch
      %109 = sbr.rel (0) target = $region37
    $region36: #{tpu_custom_call.1} parent=1 // pred_region
      %s111 = ssub.s32 256, 256
      %112 = vsyncadd [#allocation18], %s111
      %s113 = sshll.u32 [#allocation17], 4
      %s114 = int_to_ptr.vmem [resolvable:$true] %s113
      %119 = dma.hbm_to_vmem [thread:$0]  %s8, 256, %s114, [#allocation18], 64, 64, 4
    $region37: #{tpu_custom_call.1} parent=1 // pred_fallthru
      _
    // Predicated region
    $region38: #{tpu_custom_call.1} parent=1 // pred_check
      _
    $region39: #{tpu_custom_call.1} parent=1 // pred_check_branch
      %121 = sbr.rel (0) target = $region41
    $region40: #{tpu_custom_call.1} parent=1 // pred_region
      _
    $region41: #{tpu_custom_call.1} parent=1 // pred_fallthru
      _
    // Predicated region
    $region42: #{tpu_custom_call.1} parent=1 // pred_check
      _
    $region43: #{tpu_custom_call.1} parent=1 // pred_check_branch
      %123 = sbr.rel (0) target = $region45
    $region44: #{tpu_custom_call.1} parent=1 // pred_region
      %s125 = ssub.s32 16, 16
      %126 = vsyncadd [#allocation18], %s125
      %s128 = sshll.u32 [#allocation19], 4
      %s129 = int_to_ptr.vmem [resolvable:$true] %s128
      %131 = dma.hbm_to_vmem [thread:$0]  %s10, 16, %s129, [#allocation18]
    $region45: #{tpu_custom_call.1} parent=1 // pred_fallthru
      _
    // Predicated region
    $region46: #{tpu_custom_call.1} parent=1 // pred_check
      _
    $region47: #{tpu_custom_call.1} parent=1 // pred_check_branch
      %133 = sbr.rel (0) target = $region49
    $region48: #{tpu_custom_call.1} parent=1 // pred_region
      _
    $region49: #{tpu_custom_call.1} parent=1 // pred_fallthru
      _
    // Predicated region
    $region50: #{tpu_custom_call.1} parent=1 // pred_check
      _
    $region51: #{tpu_custom_call.1} parent=1 // pred_check_branch
      %135 = sbr.rel (0) target = $region53
    $region52: #{tpu_custom_call.1} parent=1 // pred_region
      %s137 = ssub.s32 256, 256
      %138 = vsyncadd [#allocation21], %s137
      %s139 = sshll.u32 [#allocation20], 4
      %s140 = int_to_ptr.vmem [resolvable:$true] %s139
      %145 = dma.hbm_to_vmem [thread:$0]  %s12, 256, %s140, [#allocation21], 64, 64, 4
    $region53: #{tpu_custom_call.1} parent=1 // pred_fallthru
      _
    // Predicated region
    $region54: #{tpu_custom_call.1} parent=1 // pred_check
      _
    $region55: #{tpu_custom_call.1} parent=1 // pred_check_branch
      %147 = sbr.rel (0) target = $region57
    $region56: #{tpu_custom_call.1} parent=1 // pred_region
      _
    $region57: #{tpu_custom_call.1} parent=1 // pred_fallthru
      _
    // Predicated region
    $region58: #{tpu_custom_call.1} parent=1 // pred_check
      _
    $region59: #{tpu_custom_call.1} parent=1 // pred_check_branch
      %149 = sbr.rel (0) target = $region61
    $region60: #{tpu_custom_call.1} parent=1 // pred_region
      %150 = dma.done [#allocation6], 80
    $region61: #{tpu_custom_call.1} parent=1 // pred_fallthru
      _
    // Predicated region
    $region62: #{tpu_custom_call.1} parent=1 // pred_check
      _
    $region63: #{tpu_custom_call.1} parent=1 // pred_check_branch
      %152 = sbr.rel (0) target = $region65
    $region64: #{tpu_custom_call.1} parent=1 // pred_region
      %153 = dma.done [#allocation9], 128
    $region65: #{tpu_custom_call.1} parent=1 // pred_fallthru
      _
    // Predicated region
    $region66: #{tpu_custom_call.1} parent=1 // pred_check
      _
    $region67: #{tpu_custom_call.1} parent=1 // pred_check_branch
      %155 = sbr.rel (0) target = $region69
    $region68: #{tpu_custom_call.1} parent=1 // pred_region
      %156 = dma.done [#allocation9], 32
    $region69: #{tpu_custom_call.1} parent=1 // pred_fallthru
      _
    // Predicated region
    $region70: #{tpu_custom_call.1} parent=1 // pred_check
      _
    $region71: #{tpu_custom_call.1} parent=1 // pred_check_branch
      %158 = sbr.rel (0) target = $region73
    $region72: #{tpu_custom_call.1} parent=1 // pred_region
      %159 = dma.done [#allocation12], 32
    $region73: #{tpu_custom_call.1} parent=1 // pred_fallthru
      _
    // Predicated region
    $region74: #{tpu_custom_call.1} parent=1 // pred_check
      _
    $region75: #{tpu_custom_call.1} parent=1 // pred_check_branch
      %161 = sbr.rel (0) target = $region77
    $region76: #{tpu_custom_call.1} parent=1 // pred_region
      %162 = dma.done [#allocation12], 256
    $region77: #{tpu_custom_call.1} parent=1 // pred_fallthru
      _
    // Predicated region
    $region78: #{tpu_custom_call.1} parent=1 // pred_check
      _
    $region79: #{tpu_custom_call.1} parent=1 // pred_check_branch
      %164 = sbr.rel (0) target = $region81
    $region80: #{tpu_custom_call.1} parent=1 // pred_region
      %165 = dma.done [#allocation15], 256
    $region81: #{tpu_custom_call.1} parent=1 // pred_fallthru
      _
    // Predicated region
    $region82: #{tpu_custom_call.1} parent=1 // pred_check
      _
    $region83: #{tpu_custom_call.1} parent=1 // pred_check_branch
      %167 = sbr.rel (0) target = $region85
    $region84: #{tpu_custom_call.1} parent=1 // pred_region
      %168 = dma.done [#allocation15], 256
    $region85: #{tpu_custom_call.1} parent=1 // pred_fallthru
      _
    // Predicated region
    $region86: #{tpu_custom_call.1} parent=1 // pred_check
      _
    $region87: #{tpu_custom_call.1} parent=1 // pred_check_branch
      %170 = sbr.rel (0) target = $region89
    $region88: #{tpu_custom_call.1} parent=1 // pred_region
      %171 = dma.done [#allocation18], 256
    $region89: #{tpu_custom_call.1} parent=1 // pred_fallthru
      _
    // Predicated region
    $region90: #{tpu_custom_call.1} parent=1 // pred_check
      _
    $region91: #{tpu_custom_call.1} parent=1 // pred_check_branch
      %173 = sbr.rel (0) target = $region93
    $region92: #{tpu_custom_call.1} parent=1 // pred_region
      %174 = dma.done [#allocation18], 16
    $region93: #{tpu_custom_call.1} parent=1 // pred_fallthru
      _
    // Predicated region
    $region94: #{tpu_custom_call.1} parent=1 // pred_check
      _
    $region95: #{tpu_custom_call.1} parent=1 // pred_check_branch
      %176 = sbr.rel (0) target = $region97
    $region96: #{tpu_custom_call.1} parent=1 // pred_region
      %177 = dma.done [#allocation21], 256
    $region97: #{tpu_custom_call.1} parent=1 // pred_fallthru
      _
    %p179 = scmp.eq.s32.totalorder 0, 0
    // Predicated region
    $region98: #{tpu_custom_call.1} parent=1 // pred_check
      %p180 = pneg %p179
    $region99: #{tpu_custom_call.1} parent=1 // pred_check_branch
      %182 = sbr.rel (%p180) target = $region101
    $region100: #{tpu_custom_call.1} parent=1 // pred_region
      %v183 = vld [vmem:[#allocation10] sm:$0x3]
      %vm184 = vcmask 254976
      %185 = vst.msk [vmem:[#allocation2] sm:$0x3] %vm184, %v183
      %v186 = vld [vmem:[#allocation11] sm:$0x3]
      %187 = vst.msk [vmem:[#allocation3] sm:$0x3] %vm184, %v186
      %188 = vst.msk [vmem:[#allocation4] sm:$0x3] %vm184, 0.0
    $region101: #{tpu_custom_call.1} parent=1 // pred_fallthru
      _
    %v189 = vld [vmem:[%s9] sm:$0x1]
    %v191 = vlaneseq
    %v192 = vshrl.u32 %v191, 7
    %v193 = vsub.s32 0, %v192
    %v194 = vrot.slane %v189, %v193
    %v196 = vld [vmem:[#allocation19] sm:$0x1]
    %v198 = vlaneseq
    %v199 = vshrl.u32 %v198, 7
    %v200 = vsub.s32 0, %v199
    %v201 = vrot.slane %v196, %v200
    %v203 = vld [vmem:[#allocation2] sm:$0x3]
    %v204 = vld [vmem:[#allocation3] sm:$0x3]
    %v205 = vld [vmem:[#allocation4] sm:$0x3]
    loop: start=0, step=1, limit=5
    $region102: #{tpu_custom_call.1} parent=1 // loop_pre_header
      _
    $region103: #{tpu_custom_call.1} parent=1 // loop_header
      %s207 = sphi 0, %s211
      %p208 = scmp.ge.s32.totalorder %s207, 5
      %v212 = vphi %v203, %v1008
      %v213 = vphi %v204, %v1012
      %v214 = vphi %v205, %v1001
    $region104: #{tpu_custom_call.1} parent=1 // loop_header_branch
      %210 = sbr.rel (%p208) target = $region108
    $region105: #{tpu_custom_call.1} parent=1 // loop_body
      %s215 = scalar_lea.vmem [#allocation5], %s207
      %v216 = vld [vmem:[%s215] sm:$0x1]
      %v217 = vpack.c.bf16 %v212, %v212
      %v218 = vld [vmem:[#allocation13] sm:$0xf]
      %v219 = vld [vmem:[#allocation13 + $0x4] sm:$0xf]
      %v220 = vld [vmem:[#allocation13 + $0x8] sm:$0xf]
      %v221 = vld [vmem:[#allocation13 + $0xc] sm:$0xf]
      %v222 = vpack.c.bf16 %v214, %v214
      %v223 = vld [vmem:[%s5] sm:$0xf]
      %v224 = vld [vmem:[%s5 + $0x4] sm:$0xf]
      %v225 = vld [vmem:[%s5 + $0x8] sm:$0xf]
      %v226 = vld [vmem:[%s5 + $0xc] sm:$0xf]
      %v231 = vunpack.c.l.b16 %v223
      %v232 = vunpack.c.l.b16 %v224
      %v233 = vunpack.c.l.b16 %v225
      %v234 = vunpack.c.l.b16 %v226
      %v235 = vpack.c.b16 %v232, %v231
      %v236 = vpack.c.b16 %v234, %v233
      %vm239 = vcmask 261120
      %v241 = vsel %vm239, %v222, 0
      %243 = vmatprep.subr.bf16.mxu0 0
      %244 = vmatpush1.bf16.msra.mxu0 %v235
      %245 = vmatprep.subr.bf16.mxu0 0
      %246 = vmatpush1.bf16.msra.mxu0 %v236
      %247 = vmatprep.subr.bf16.mxu0 0
      %248 = vmatpush1.bf16.msra.mxu0 0
      %249 = vmatprep.subr.bf16.mxu0 0
      %250 = vmatpush1.bf16.msra.mxu0 0
      %251 = vmatprep.subr.bf16.mxu0 0
      %252 = vmatpush1.bf16.msra.mxu0 0
      %253 = vmatprep.subr.bf16.mxu0 0
      %254 = vmatpush1.bf16.msra.mxu0 0
      %255 = vmatprep.subr.bf16.mxu0 0
      %256 = vmatpush1.bf16.msra.mxu0 0
      %257 = vmatprep.subr.bf16.mxu0 0
      %258 = vmatpush1.bf16.msra.mxu0 0
      %259 = vmatprep.subr.bf16.mxu0 0
      %260 = vmatpush1.bf16.msra.mxu0 0
      %261 = vmatprep.subr.bf16.mxu0 0
      %262 = vmatpush1.bf16.msra.mxu0 0
      %263 = vmatprep.subr.bf16.mxu0 0
      %264 = vmatpush1.bf16.msra.mxu0 0
      %265 = vmatprep.subr.bf16.mxu0 0
      %266 = vmatpush1.bf16.msra.mxu0 0
      %267 = vmatprep.subr.bf16.mxu0 0
      %268 = vmatpush1.bf16.msra.mxu0 0
      %269 = vmatprep.subr.bf16.mxu0 0
      %270 = vmatpush1.bf16.msra.mxu0 0
      %271 = vmatprep.subr.bf16.mxu0 0
      %272 = vmatpush1.bf16.msra.mxu0 0
      %273 = vmatprep.subr.bf16.mxu0 0
      %274 = vmatpush1.bf16.msra.mxu0 0
      %275 = vmatprep.mubr.bf16.mxu0 0
      %276 = vmatmul.mubr.bf16.gmra.mrb[0].mxu0 %v241
      %v277 = vpop.f32.mrb[0].mxu0
      %v278 = vadd.f32 0.0, %v277
      %v279 = vpop.f32.mrb[0].mxu0
      %v280 = vpop.f32.mrb[0].mxu0
      %v281 = vpop.f32.mrb[0].mxu0
      %282 = vdwg.mxu0
      %v287 = vunpack.c.l.b16 %v218
      %v288 = vunpack.c.l.b16 %v219
      %v289 = vunpack.c.l.b16 %v220
      %v290 = vunpack.c.l.b16 %v221
      %v291 = vpack.c.b16 %v288, %v287
      %v292 = vpack.c.b16 %v290, %v289
      %v296 = vsel %vm239, %v216, 0
      %298 = vmatprep.subr.bf16.mxu0 0
      %299 = vmatpush1.bf16.msra.mxu0 %v291
      %300 = vmatprep.subr.bf16.mxu0 0
      %301 = vmatpush1.bf16.msra.mxu0 %v292
      %302 = vmatprep.subr.bf16.mxu0 0
      %303 = vmatpush1.bf16.msra.mxu0 0
      %304 = vmatprep.subr.bf16.mxu0 0
      %305 = vmatpush1.bf16.msra.mxu0 0
      %306 = vmatprep.subr.bf16.mxu0 0
      %307 = vmatpush1.bf16.msra.mxu0 0
      %308 = vmatprep.subr.bf16.mxu0 0
      %309 = vmatpush1.bf16.msra.mxu0 0
      %310 = vmatprep.subr.bf16.mxu0 0
      %311 = vmatpush1.bf16.msra.mxu0 0
      %312 = vmatprep.subr.bf16.mxu0 0
      %313 = vmatpush1.bf16.msra.mxu0 0
      %314 = vmatprep.subr.bf16.mxu0 0
      %315 = vmatpush1.bf16.msra.mxu0 0
      %316 = vmatprep.subr.bf16.mxu0 0
      %317 = vmatpush1.bf16.msra.mxu0 0
      %318 = vmatprep.subr.bf16.mxu0 0
      %319 = vmatpush1.bf16.msra.mxu0 0
      %320 = vmatprep.subr.bf16.mxu0 0
      %321 = vmatpush1.bf16.msra.mxu0 0
      %322 = vmatprep.subr.bf16.mxu0 0
      %323 = vmatpush1.bf16.msra.mxu0 0
      %324 = vmatprep.subr.bf16.mxu0 0
      %325 = vmatpush1.bf16.msra.mxu0 0
      %326 = vmatprep.subr.bf16.mxu0 0
      %327 = vmatpush1.bf16.msra.mxu0 0
      %328 = vmatprep.subr.bf16.mxu0 0
      %329 = vmatpush1.bf16.msra.mxu0 0
      %330 = vmatprep.mubr.bf16.mxu0 0
      %331 = vmatmul.mubr.bf16.gmra.mrb[0].mxu0 %v296
      %v332 = vpop.f32.mrb[0].mxu0
      %v333 = vadd.f32 %v278, %v332
      %v334 = vpop.f32.mrb[0].mxu0
      %v335 = vpop.f32.mrb[0].mxu0
      %v336 = vpop.f32.mrb[0].mxu0
      %337 = vdwg.mxu0
      %v338 = vld [vmem:[#allocation14] sm:$0xf]
      %v339 = vld [vmem:[#allocation14 + $0x4] sm:$0xf]
      %v340 = vld [vmem:[#allocation14 + $0x8] sm:$0xf]
      %v341 = vld [vmem:[#allocation14 + $0xc] sm:$0xf]
      %v346 = vunpack.c.l.b16 %v338
      %v347 = vunpack.c.l.b16 %v339
      %v348 = vunpack.c.l.b16 %v340
      %v349 = vunpack.c.l.b16 %v341
      %v350 = vpack.c.b16 %v347, %v346
      %v351 = vpack.c.b16 %v349, %v348
      %v355 = vsel %vm239, %v217, 0
      %357 = vmatprep.subr.bf16.mxu0 0
      %358 = vmatpush1.bf16.msra.mxu0 %v350
      %359 = vmatprep.subr.bf16.mxu0 0
      %360 = vmatpush1.bf16.msra.mxu0 %v351
      %361 = vmatprep.subr.bf16.mxu0 0
      %362 = vmatpush1.bf16.msra.mxu0 0
      %363 = vmatprep.subr.bf16.mxu0 0
      %364 = vmatpush1.bf16.msra.mxu0 0
      %365 = vmatprep.subr.bf16.mxu0 0
      %366 = vmatpush1.bf16.msra.mxu0 0
      %367 = vmatprep.subr.bf16.mxu0 0
      %368 = vmatpush1.bf16.msra.mxu0 0
      %369 = vmatprep.subr.bf16.mxu0 0
      %370 = vmatpush1.bf16.msra.mxu0 0
      %371 = vmatprep.subr.bf16.mxu0 0
      %372 = vmatpush1.bf16.msra.mxu0 0
      %373 = vmatprep.subr.bf16.mxu0 0
      %374 = vmatpush1.bf16.msra.mxu0 0
      %375 = vmatprep.subr.bf16.mxu0 0
      %376 = vmatpush1.bf16.msra.mxu0 0
      %377 = vmatprep.subr.bf16.mxu0 0
      %378 = vmatpush1.bf16.msra.mxu0 0
      %379 = vmatprep.subr.bf16.mxu0 0
      %380 = vmatpush1.bf16.msra.mxu0 0
      %381 = vmatprep.subr.bf16.mxu0 0
      %382 = vmatpush1.bf16.msra.mxu0 0
      %383 = vmatprep.subr.bf16.mxu0 0
      %384 = vmatpush1.bf16.msra.mxu0 0
      %385 = vmatprep.subr.bf16.mxu0 0
      %386 = vmatpush1.bf16.msra.mxu0 0
      %387 = vmatprep.subr.bf16.mxu0 0
      %388 = vmatpush1.bf16.msra.mxu0 0
      %389 = vmatprep.mubr.bf16.mxu0 0
      %390 = vmatmul.mubr.bf16.gmra.mrb[0].mxu0 %v355
      %v391 = vpop.f32.mrb[0].mxu0
      %v392 = vadd.f32 0.0, %v391
      %v393 = vpop.f32.mrb[0].mxu0
      %v394 = vpop.f32.mrb[0].mxu0
      %v395 = vpop.f32.mrb[0].mxu0
      %396 = vdwg.mxu0
      %v397 = vadd.f32 %v333, %v392
      %v398 = vadd.f32 %v397, %v194
      %v399 = vxor.u32 %v398, 2147483648
      %v400 = vmul.f32 %v399, 1.442695
      %v401 = vpow.pop %v400
      %v402 = vadd.f32 %v401, 1.0
      %v403 = vrcp.pop %v402
      %v404 = vmul.f32 1.0, %v403
      %v405 = vtanh.pop %v398
      %407 = vrot.lane.b32.xlu0 %v213, 32
      %v408 = vpop.permute.xlu0 %407
      %v410 = vmul.f32 %v404, %v408
      %412 = vrot.lane.b32.xlu0 %v405, 64
      %v413 = vpop.permute.xlu0 %412
      %v415 = vmul.f32 %v404, %v413
      %417 = vrot.lane.b32.xlu0 %v415, 32
      %v418 = vpop.permute.xlu0 %417
      %v420 = vadd.f32 %v410, %v418
      %v421 = vtanh.pop %v420
      %423 = vrot.lane.b32.xlu0 %v421, 64
      %v424 = vpop.permute.xlu0 %423
      %v426 = vmul.f32 %v404, %v424
      %v427 = vpack.c.bf16 %v426, %v426
      %v428 = vld [vmem:[#allocation16] sm:$0xf]
      %v429 = vld [vmem:[#allocation16 + $0x4] sm:$0xf]
      %v430 = vld [vmem:[#allocation16 + $0x8] sm:$0xf]
      %v431 = vld [vmem:[#allocation16 + $0xc] sm:$0xf]
      %v432 = vld [vmem:[#allocation17] sm:$0xf]
      %v433 = vld [vmem:[#allocation17 + $0x4] sm:$0xf]
      %v434 = vld [vmem:[#allocation17 + $0x8] sm:$0xf]
      %v435 = vld [vmem:[#allocation17 + $0xc] sm:$0xf]
      %437 = vrot.lane.b32.xlu0 %v427, 32
      %v438 = vpop.permute.xlu0 %437
      %v443 = vunpack.c.l.b16 %v432
      %v444 = vunpack.c.l.b16 %v433
      %v445 = vunpack.c.l.b16 %v434
      %v446 = vunpack.c.l.b16 %v435
      %v447 = vpack.c.b16 %v444, %v443
      %v448 = vpack.c.b16 %v446, %v445
      %v452 = vsel %vm239, %v438, 0
      %454 = vmatprep.subr.bf16.mxu0 0
      %455 = vmatpush1.bf16.msra.mxu0 %v447
      %456 = vmatprep.subr.bf16.mxu0 0
      %457 = vmatpush1.bf16.msra.mxu0 %v448
      %458 = vmatprep.subr.bf16.mxu0 0
      %459 = vmatpush1.bf16.msra.mxu0 0
      %460 = vmatprep.subr.bf16.mxu0 0
      %461 = vmatpush1.bf16.msra.mxu0 0
      %462 = vmatprep.subr.bf16.mxu0 0
      %463 = vmatpush1.bf16.msra.mxu0 0
      %464 = vmatprep.subr.bf16.mxu0 0
      %465 = vmatpush1.bf16.msra.mxu0 0
      %466 = vmatprep.subr.bf16.mxu0 0
      %467 = vmatpush1.bf16.msra.mxu0 0
      %468 = vmatprep.subr.bf16.mxu0 0
      %469 = vmatpush1.bf16.msra.mxu0 0
      %470 = vmatprep.subr.bf16.mxu0 0
      %471 = vmatpush1.bf16.msra.mxu0 0
      %472 = vmatprep.subr.bf16.mxu0 0
      %473 = vmatpush1.bf16.msra.mxu0 0
      %474 = vmatprep.subr.bf16.mxu0 0
      %475 = vmatpush1.bf16.msra.mxu0 0
      %476 = vmatprep.subr.bf16.mxu0 0
      %477 = vmatpush1.bf16.msra.mxu0 0
      %478 = vmatprep.subr.bf16.mxu0 0
      %479 = vmatpush1.bf16.msra.mxu0 0
      %480 = vmatprep.subr.bf16.mxu0 0
      %481 = vmatpush1.bf16.msra.mxu0 0
      %482 = vmatprep.subr.bf16.mxu0 0
      %483 = vmatpush1.bf16.msra.mxu0 0
      %484 = vmatprep.subr.bf16.mxu0 0
      %485 = vmatpush1.bf16.msra.mxu0 0
      %486 = vmatprep.mubr.bf16.mxu0 0
      %487 = vmatmul.mubr.bf16.gmra.mrb[0].mxu0 %v452
      %v488 = vpop.f32.mrb[0].mxu0
      %v489 = vadd.f32 0.0, %v488
      %v490 = vpop.f32.mrb[0].mxu0
      %v491 = vpop.f32.mrb[0].mxu0
      %v492 = vpop.f32.mrb[0].mxu0
      %493 = vdwg.mxu0
      %v498 = vunpack.c.l.b16 %v428
      %v499 = vunpack.c.l.b16 %v429
      %v500 = vunpack.c.l.b16 %v430
      %v501 = vunpack.c.l.b16 %v431
      %v502 = vpack.c.b16 %v499, %v498
      %v503 = vpack.c.b16 %v501, %v500
      %506 = vmatprep.subr.bf16.mxu0 0
      %507 = vmatpush1.bf16.msra.mxu0 %v502
      %508 = vmatprep.subr.bf16.mxu0 0
      %509 = vmatpush1.bf16.msra.mxu0 %v503
      %510 = vmatprep.subr.bf16.mxu0 0
      %511 = vmatpush1.bf16.msra.mxu0 0
      %512 = vmatprep.subr.bf16.mxu0 0
      %513 = vmatpush1.bf16.msra.mxu0 0
      %514 = vmatprep.subr.bf16.mxu0 0
      %515 = vmatpush1.bf16.msra.mxu0 0
      %516 = vmatprep.subr.bf16.mxu0 0
      %517 = vmatpush1.bf16.msra.mxu0 0
      %518 = vmatprep.subr.bf16.mxu0 0
      %519 = vmatpush1.bf16.msra.mxu0 0
      %520 = vmatprep.subr.bf16.mxu0 0
      %521 = vmatpush1.bf16.msra.mxu0 0
      %522 = vmatprep.subr.bf16.mxu0 0
      %523 = vmatpush1.bf16.msra.mxu0 0
      %524 = vmatprep.subr.bf16.mxu0 0
      %525 = vmatpush1.bf16.msra.mxu0 0
      %526 = vmatprep.subr.bf16.mxu0 0
      %527 = vmatpush1.bf16.msra.mxu0 0
      %528 = vmatprep.subr.bf16.mxu0 0
      %529 = vmatpush1.bf16.msra.mxu0 0
      %530 = vmatprep.subr.bf16.mxu0 0
      %531 = vmatpush1.bf16.msra.mxu0 0
      %532 = vmatprep.subr.bf16.mxu0 0
      %533 = vmatpush1.bf16.msra.mxu0 0
      %534 = vmatprep.subr.bf16.mxu0 0
      %535 = vmatpush1.bf16.msra.mxu0 0
      %536 = vmatprep.subr.bf16.mxu0 0
      %537 = vmatpush1.bf16.msra.mxu0 0
      %538 = vmatprep.mubr.bf16.mxu0 0
      %539 = vmatmul.mubr.bf16.gmra.mrb[0].mxu0 %v452
      %v540 = vpop.f32.mrb[0].mxu0
      %v541 = vadd.f32 %v489, %v540
      %v542 = vpop.f32.mrb[0].mxu0
      %v543 = vpop.f32.mrb[0].mxu0
      %v544 = vpop.f32.mrb[0].mxu0
      %545 = vdwg.mxu0
      %v546 = vadd.f32 %v541, %v201
      %v547 = vxor.u32 %v546, 2147483648
      %v548 = vmul.f32 %v547, 1.442695
      %v549 = vpow.pop %v548
      %v550 = vadd.f32 %v549, 1.0
      %v551 = vrcp.pop %v550
      %v552 = vmul.f32 1.0, %v551
      %v553 = vtanh.pop %v546
      %v554 = vmul.f32 %v552, %v420
      %556 = vrot.lane.b32.xlu0 %v553, 64
      %v557 = vpop.permute.xlu0 %556
      %v559 = vmul.f32 %v552, %v557
      %561 = vrot.lane.b32.xlu0 %v559, 32
      %v562 = vpop.permute.xlu0 %561
      %v564 = vadd.f32 %v554, %v562
      %v565 = vtanh.pop %v564
      %567 = vrot.lane.b32.xlu0 %v565, 64
      %v568 = vpop.permute.xlu0 %567
      %v570 = vmul.f32 %v552, %v568
      %v571 = vpack.c.bf16 %v570, %v570
      %v572 = vld [vmem:[%s11] sm:$0xf]
      %v573 = vld [vmem:[%s11 + $0x4] sm:$0xf]
      %v574 = vld [vmem:[%s11 + $0x8] sm:$0xf]
      %v575 = vld [vmem:[%s11 + $0xc] sm:$0xf]
      %577 = vrot.lane.b32.xlu0 %v571, 32
      %v578 = vpop.permute.xlu0 %577
      %v583 = vunpack.c.l.b16 %v572
      %v584 = vunpack.c.l.b16 %v573
      %v585 = vunpack.c.l.b16 %v574
      %v586 = vunpack.c.l.b16 %v575
      %v587 = vpack.c.b16 %v584, %v583
      %v588 = vpack.c.b16 %v586, %v585
      %v592 = vsel %vm239, %v578, 0
      %594 = vmatprep.subr.bf16.mxu0 0
      %595 = vmatpush1.bf16.msra.mxu0 %v587
      %596 = vmatprep.subr.bf16.mxu0 0
      %597 = vmatpush1.bf16.msra.mxu0 %v588
      %598 = vmatprep.subr.bf16.mxu0 0
      %599 = vmatpush1.bf16.msra.mxu0 0
      %600 = vmatprep.subr.bf16.mxu0 0
      %601 = vmatpush1.bf16.msra.mxu0 0
      %602 = vmatprep.subr.bf16.mxu0 0
      %603 = vmatpush1.bf16.msra.mxu0 0
      %604 = vmatprep.subr.bf16.mxu0 0
      %605 = vmatpush1.bf16.msra.mxu0 0
      %606 = vmatprep.subr.bf16.mxu0 0
      %607 = vmatpush1.bf16.msra.mxu0 0
      %608 = vmatprep.subr.bf16.mxu0 0
      %609 = vmatpush1.bf16.msra.mxu0 0
      %610 = vmatprep.subr.bf16.mxu0 0
      %611 = vmatpush1.bf16.msra.mxu0 0
      %612 = vmatprep.subr.bf16.mxu0 0
      %613 = vmatpush1.bf16.msra.mxu0 0
      %614 = vmatprep.subr.bf16.mxu0 0
      %615 = vmatpush1.bf16.msra.mxu0 0
      %616 = vmatprep.subr.bf16.mxu0 0
      %617 = vmatpush1.bf16.msra.mxu0 0
      %618 = vmatprep.subr.bf16.mxu0 0
      %619 = vmatpush1.bf16.msra.mxu0 0
      %620 = vmatprep.subr.bf16.mxu0 0
      %621 = vmatpush1.bf16.msra.mxu0 0
      %622 = vmatprep.subr.bf16.mxu0 0
      %623 = vmatpush1.bf16.msra.mxu0 0
      %624 = vmatprep.subr.bf16.mxu0 0
      %625 = vmatpush1.bf16.msra.mxu0 0
      %626 = vmatprep.mubr.bf16.mxu0 0
      %627 = vmatmul.mubr.bf16.gmra.mrb[0].mxu0 %v592
      %v628 = vpop.f32.mrb[0].mxu0
      %v629 = vadd.f32 0.0, %v628
      %v630 = vpop.f32.mrb[0].mxu0
      %v631 = vpop.f32.mrb[0].mxu0
      %v632 = vpop.f32.mrb[0].mxu0
      %633 = vdwg.mxu0
      %v636 = vunpack.c.l.s4 1966171168
      %v637 = vunpack.c.0.s8 %v636
      %v638 = vlaneseq
      %v639 = vshrl.u32 %v638, 7
      %v640 = vsub.s32 %v637, %v639
      %v641 = vrot.slane %v629, %v640
      %v642 = vcombine.high %v641, %v641
      %v644 = vunpack.c.l.s4 1966171168
      %v645 = vunpack.c.0.s8 %v644
      %v646 = vlaneseq
      %v647 = vshrl.u32 %v646, 7
      %v648 = vsub.s32 %v645, %v647
      %v649 = vrot.slane %v641, %v648
      %v651 = vunpack.c.l.s4 1966171168
      %v652 = vunpack.c.0.s8 %v651
      %v653 = vlaneseq
      %v654 = vshrl.u32 %v653, 7
      %v655 = vsub.s32 %v652, %v654
      %v656 = vrot.slane %v642, %v655
      %v659 = vpack.c.bf16 %v649, %v649
      %v660 = vpack.c.bf16 %v656, %v656
      %v661 = vld [vmem:[#allocation8] sm:$0xf]
      %v662 = vld [vmem:[#allocation8 + $0x4] sm:$0xf]
      %v664 = vsel %vm239, %v659, 0
      %v667 = vsel %vm239, %v661, 0
      %669 = vmatprep.subr.bf16.mxu0 0
      %670 = vmatpush1.bf16.xpose.msra.mxu0 %v667
      %671 = vmatprep.subr.bf16.mxu0 0
      %672 = vmatpush1.bf16.xpose.msra.mxu0 0
      %673 = vmatprep.subr.bf16.mxu0 0
      %674 = vmatpush1.bf16.xpose.msra.mxu0 0
      %675 = vmatprep.subr.bf16.mxu0 0
      %676 = vmatpush1.bf16.xpose.msra.mxu0 0
      %677 = vmatprep.subr.bf16.mxu0 0
      %678 = vmatpush1.bf16.xpose.msra.mxu0 0
      %679 = vmatprep.subr.bf16.mxu0 0
      %680 = vmatpush1.bf16.xpose.msra.mxu0 0
      %681 = vmatprep.subr.bf16.mxu0 0
      %682 = vmatpush1.bf16.xpose.msra.mxu0 0
      %683 = vmatprep.subr.bf16.mxu0 0
      %684 = vmatpush1.bf16.xpose.msra.mxu0 0
      %685 = vmatprep.subr.bf16.mxu0 0
      %686 = vmatpush1.bf16.xpose.msra.mxu0 0
      %687 = vmatprep.subr.bf16.mxu0 0
      %688 = vmatpush1.bf16.xpose.msra.mxu0 0
      %689 = vmatprep.subr.bf16.mxu0 0
      %690 = vmatpush1.bf16.xpose.msra.mxu0 0
      %691 = vmatprep.subr.bf16.mxu0 0
      %692 = vmatpush1.bf16.xpose.msra.mxu0 0
      %693 = vmatprep.subr.bf16.mxu0 0
      %694 = vmatpush1.bf16.xpose.msra.mxu0 0
      %695 = vmatprep.subr.bf16.mxu0 0
      %696 = vmatpush1.bf16.xpose.msra.mxu0 0
      %697 = vmatprep.subr.bf16.mxu0 0
      %698 = vmatpush1.bf16.xpose.msra.mxu0 0
      %699 = vmatprep.subr.bf16.mxu0 0
      %700 = vmatpush1.bf16.xpose.msra.mxu0 0
      %701 = vmatprep.mubr.bf16.mxu0 0
      %702 = vmatmul.mubr.bf16.gmra.mrb[0].mxu0 %v664
      %v703 = vpop.f32.mrb[0].mxu0
      %v704 = vadd.f32 0.0, %v703
      %v705 = vpop.f32.mrb[0].mxu0
      %v706 = vpop.f32.mrb[0].mxu0
      %v707 = vpop.f32.mrb[0].mxu0
      %708 = vdwg.mxu0
      %v710 = vsel %vm239, %v660, 0
      %v713 = vsel %vm239, %v662, 0
      %715 = vmatprep.subr.bf16.mxu0 0
      %716 = vmatpush1.bf16.xpose.msra.mxu0 %v713
      %717 = vmatprep.subr.bf16.mxu0 0
      %718 = vmatpush1.bf16.xpose.msra.mxu0 0
      %719 = vmatprep.subr.bf16.mxu0 0
      %720 = vmatpush1.bf16.xpose.msra.mxu0 0
      %721 = vmatprep.subr.bf16.mxu0 0
      %722 = vmatpush1.bf16.xpose.msra.mxu0 0
      %723 = vmatprep.subr.bf16.mxu0 0
      %724 = vmatpush1.bf16.xpose.msra.mxu0 0
      %725 = vmatprep.subr.bf16.mxu0 0
      %726 = vmatpush1.bf16.xpose.msra.mxu0 0
      %727 = vmatprep.subr.bf16.mxu0 0
      %728 = vmatpush1.bf16.xpose.msra.mxu0 0
      %729 = vmatprep.subr.bf16.mxu0 0
      %730 = vmatpush1.bf16.xpose.msra.mxu0 0
      %731 = vmatprep.subr.bf16.mxu0 0
      %732 = vmatpush1.bf16.xpose.msra.mxu0 0
      %733 = vmatprep.subr.bf16.mxu0 0
      %734 = vmatpush1.bf16.xpose.msra.mxu0 0
      %735 = vmatprep.subr.bf16.mxu0 0
      %736 = vmatpush1.bf16.xpose.msra.mxu0 0
      %737 = vmatprep.subr.bf16.mxu0 0
      %738 = vmatpush1.bf16.xpose.msra.mxu0 0
      %739 = vmatprep.subr.bf16.mxu0 0
      %740 = vmatpush1.bf16.xpose.msra.mxu0 0
      %741 = vmatprep.subr.bf16.mxu0 0
      %742 = vmatpush1.bf16.xpose.msra.mxu0 0
      %743 = vmatprep.subr.bf16.mxu0 0
      %744 = vmatpush1.bf16.xpose.msra.mxu0 0
      %745 = vmatprep.subr.bf16.mxu0 0
      %746 = vmatpush1.bf16.xpose.msra.mxu0 0
      %747 = vmatprep.mubr.bf16.mxu0 0
      %748 = vmatmul.mubr.bf16.gmra.mrb[0].mxu0 %v710
      %v749 = vpop.f32.mrb[0].mxu0
      %v750 = vadd.f32 0.0, %v749
      %v751 = vpop.f32.mrb[0].mxu0
      %v752 = vpop.f32.mrb[0].mxu0
      %v753 = vpop.f32.mrb[0].mxu0
      %754 = vdwg.mxu0
      %vm755 = vcmask 57344
      %v756 = vsel %vm755, %v704, -inf
      %757 = vmax.xlane.f32.xlu0 %v756
      %v758 = vpop.xlane.xlu0 %757
      %v759 = vsel %vm755, %v750, -inf
      %760 = vmax.xlane.f32.xlu0 %v759
      %v761 = vpop.xlane.xlu0 %760
      %v762 = vsub.f32 %v704, %v758
      %v763 = vsub.f32 %v750, %v761
      %v764 = vmul.f32 %v762, 1.442695
      %v765 = vpow.pop %v764
      %v766 = vmul.f32 %v763, 1.442695
      %v767 = vpow.pop %v766
      %v768 = vsel %vm755, %v765, 0.0
      %769 = vadd.xlane.f32.xlu0 %v768
      %v770 = vpop.xlane.xlu0 %769
      %v771 = vsel %vm755, %v767, 0.0
      %772 = vadd.xlane.f32.xlu0 %v771
      %v773 = vpop.xlane.xlu0 %772
      %v774 = vrcp.pop %v770
      %v775 = vrcp.pop %v773
      %v776 = vmul.f32 %v765, %v774
      %v777 = vmul.f32 %v767, %v775
      %v778 = vpack.c.bf16 %v776, %v776
      %v779 = vpack.c.bf16 %v777, %v777
      %v780 = vld [vmem:[#allocation8] sm:$0xf]
      %v781 = vld [vmem:[#allocation8 + $0x4] sm:$0xf]
      %vm782 = vcmask 64512
      %v784 = vsel %vm782, %v778, 0
      %vm786 = vcmask 1043456
      %v788 = vsel %vm786, %v780, 0
      %790 = vmatprep.subr.bf16.mxu0 0
      %791 = vmatpush1.bf16.msra.mxu0 %v788
      %792 = vmatprep.subr.bf16.mxu0 0
      %793 = vmatpush1.bf16.msra.mxu0 0
      %794 = vmatprep.subr.bf16.mxu0 0
      %795 = vmatpush1.bf16.msra.mxu0 0
      %796 = vmatprep.subr.bf16.mxu0 0
      %797 = vmatpush1.bf16.msra.mxu0 0
      %798 = vmatprep.subr.bf16.mxu0 0
      %799 = vmatpush1.bf16.msra.mxu0 0
      %800 = vmatprep.subr.bf16.mxu0 0
      %801 = vmatpush1.bf16.msra.mxu0 0
      %802 = vmatprep.subr.bf16.mxu0 0
      %803 = vmatpush1.bf16.msra.mxu0 0
      %804 = vmatprep.subr.bf16.mxu0 0
      %805 = vmatpush1.bf16.msra.mxu0 0
      %806 = vmatprep.subr.bf16.mxu0 0
      %807 = vmatpush1.bf16.msra.mxu0 0
      %808 = vmatprep.subr.bf16.mxu0 0
      %809 = vmatpush1.bf16.msra.mxu0 0
      %810 = vmatprep.subr.bf16.mxu0 0
      %811 = vmatpush1.bf16.msra.mxu0 0
      %812 = vmatprep.subr.bf16.mxu0 0
      %813 = vmatpush1.bf16.msra.mxu0 0
      %814 = vmatprep.subr.bf16.mxu0 0
      %815 = vmatpush1.bf16.msra.mxu0 0
      %816 = vmatprep.subr.bf16.mxu0 0
      %817 = vmatpush1.bf16.msra.mxu0 0
      %818 = vmatprep.subr.bf16.mxu0 0
      %819 = vmatpush1.bf16.msra.mxu0 0
      %820 = vmatprep.subr.bf16.mxu0 0
      %821 = vmatpush1.bf16.msra.mxu0 0
      %822 = vmatprep.mubr.bf16.mxu0 0
      %823 = vmatmul.mubr.bf16.gmra.mrb[0].mxu0 %v784
      %v824 = vpop.f32.mrb[0].mxu0
      %v825 = vadd.f32 0.0, %v824
      %v826 = vpop.f32.mrb[0].mxu0
      %v827 = vpop.f32.mrb[0].mxu0
      %v828 = vpop.f32.mrb[0].mxu0
      %829 = vdwg.mxu0
      %v831 = vsel %vm782, %v779, 0
      %v834 = vsel %vm786, %v781, 0
      %836 = vmatprep.subr.bf16.mxu0 0
      %837 = vmatpush1.bf16.msra.mxu0 %v834
      %838 = vmatprep.subr.bf16.mxu0 0
      %839 = vmatpush1.bf16.msra.mxu0 0
      %840 = vmatprep.subr.bf16.mxu0 0
      %841 = vmatpush1.bf16.msra.mxu0 0
      %842 = vmatprep.subr.bf16.mxu0 0
      %843 = vmatpush1.bf16.msra.mxu0 0
      %844 = vmatprep.subr.bf16.mxu0 0
      %845 = vmatpush1.bf16.msra.mxu0 0
      %846 = vmatprep.subr.bf16.mxu0 0
      %847 = vmatpush1.bf16.msra.mxu0 0
      %848 = vmatprep.subr.bf16.mxu0 0
      %849 = vmatpush1.bf16.msra.mxu0 0
      %850 = vmatprep.subr.bf16.mxu0 0
      %851 = vmatpush1.bf16.msra.mxu0 0
      %852 = vmatprep.subr.bf16.mxu0 0
      %853 = vmatpush1.bf16.msra.mxu0 0
      %854 = vmatprep.subr.bf16.mxu0 0
      %855 = vmatpush1.bf16.msra.mxu0 0
      %856 = vmatprep.subr.bf16.mxu0 0
      %857 = vmatpush1.bf16.msra.mxu0 0
      %858 = vmatprep.subr.bf16.mxu0 0
      %859 = vmatpush1.bf16.msra.mxu0 0
      %860 = vmatprep.subr.bf16.mxu0 0
      %861 = vmatpush1.bf16.msra.mxu0 0
      %862 = vmatprep.subr.bf16.mxu0 0
      %863 = vmatpush1.bf16.msra.mxu0 0
      %864 = vmatprep.subr.bf16.mxu0 0
      %865 = vmatpush1.bf16.msra.mxu0 0
      %866 = vmatprep.subr.bf16.mxu0 0
      %867 = vmatpush1.bf16.msra.mxu0 0
      %868 = vmatprep.mubr.bf16.mxu0 0
      %869 = vmatmul.mubr.bf16.gmra.mrb[0].mxu0 %v831
      %v870 = vpop.f32.mrb[0].mxu0
      %v871 = vadd.f32 0.0, %v870
      %v872 = vpop.f32.mrb[0].mxu0
      %v873 = vpop.f32.mrb[0].mxu0
      %v874 = vpop.f32.mrb[0].mxu0
      %875 = vdwg.mxu0
      %v876 = vld [vmem:[#allocation20] sm:$0xf]
      %v877 = vld [vmem:[#allocation20 + $0x4] sm:$0xf]
      %v878 = vld [vmem:[#allocation20 + $0x8] sm:$0xf]
      %v879 = vld [vmem:[#allocation20 + $0xc] sm:$0xf]
      %v880 = vpack.c.bf16 %v825, %v825
      %v881 = vpack.c.bf16 %v871, %v871
      %v882 = vld [vmem:[%s13] sm:$0xf]
      %v883 = vld [vmem:[%s13 + $0x4] sm:$0xf]
      %v884 = vld [vmem:[%s13 + $0x8] sm:$0xf]
      %v885 = vld [vmem:[%s13 + $0xc] sm:$0xf]
      %v888 = vunpack.c.l.b16 %v880
      %v889 = vunpack.c.l.b16 %v881
      %v890 = vrot.slane %v889, 7
      %vm891 = vcmask 1041409
      %v892 = vsel %vm891, %v890, %v888
      %v893 = vpack.c.b16 %v892, %v892
      %v898 = vunpack.c.l.b16 %v882
      %v899 = vunpack.c.l.b16 %v883
      %v900 = vunpack.c.l.b16 %v884
      %v901 = vunpack.c.l.b16 %v885
      %v902 = vpack.c.b16 %v899, %v898
      %v903 = vpack.c.b16 %v901, %v900
      %v907 = vsel %vm239, %v893, 0
      %909 = vmatprep.subr.bf16.mxu0 0
      %910 = vmatpush1.bf16.msra.mxu0 %v902
      %911 = vmatprep.subr.bf16.mxu0 0
      %912 = vmatpush1.bf16.msra.mxu0 %v903
      %913 = vmatprep.subr.bf16.mxu0 0
      %914 = vmatpush1.bf16.msra.mxu0 0
      %915 = vmatprep.subr.bf16.mxu0 0
      %916 = vmatpush1.bf16.msra.mxu0 0
      %917 = vmatprep.subr.bf16.mxu0 0
      %918 = vmatpush1.bf16.msra.mxu0 0
      %919 = vmatprep.subr.bf16.mxu0 0
      %920 = vmatpush1.bf16.msra.mxu0 0
      %921 = vmatprep.subr.bf16.mxu0 0
      %922 = vmatpush1.bf16.msra.mxu0 0
      %923 = vmatprep.subr.bf16.mxu0 0
      %924 = vmatpush1.bf16.msra.mxu0 0
      %925 = vmatprep.subr.bf16.mxu0 0
      %926 = vmatpush1.bf16.msra.mxu0 0
      %927 = vmatprep.subr.bf16.mxu0 0
      %928 = vmatpush1.bf16.msra.mxu0 0
      %929 = vmatprep.subr.bf16.mxu0 0
      %930 = vmatpush1.bf16.msra.mxu0 0
      %931 = vmatprep.subr.bf16.mxu0 0
      %932 = vmatpush1.bf16.msra.mxu0 0
      %933 = vmatprep.subr.bf16.mxu0 0
      %934 = vmatpush1.bf16.msra.mxu0 0
      %935 = vmatprep.subr.bf16.mxu0 0
      %936 = vmatpush1.bf16.msra.mxu0 0
      %937 = vmatprep.subr.bf16.mxu0 0
      %938 = vmatpush1.bf16.msra.mxu0 0
      %939 = vmatprep.subr.bf16.mxu0 0
      %940 = vmatpush1.bf16.msra.mxu0 0
      %941 = vmatprep.mubr.bf16.mxu0 0
      %942 = vmatmul.mubr.bf16.gmra.mrb[0].mxu0 %v907
      %v943 = vpop.f32.mrb[0].mxu0
      %v944 = vadd.f32 0.0, %v943
      %v945 = vpop.f32.mrb[0].mxu0
      %v946 = vpop.f32.mrb[0].mxu0
      %v947 = vpop.f32.mrb[0].mxu0
      %948 = vdwg.mxu0
      %v953 = vunpack.c.l.b16 %v876
      %v954 = vunpack.c.l.b16 %v877
      %v955 = vunpack.c.l.b16 %v878
      %v956 = vunpack.c.l.b16 %v879
      %v957 = vpack.c.b16 %v954, %v953
      %v958 = vpack.c.b16 %v956, %v955
      %961 = vmatprep.subr.bf16.mxu0 0
      %962 = vmatpush1.bf16.msra.mxu0 %v957
      %963 = vmatprep.subr.bf16.mxu0 0
      %964 = vmatpush1.bf16.msra.mxu0 %v958
      %965 = vmatprep.subr.bf16.mxu0 0
      %966 = vmatpush1.bf16.msra.mxu0 0
      %967 = vmatprep.subr.bf16.mxu0 0
      %968 = vmatpush1.bf16.msra.mxu0 0
      %969 = vmatprep.subr.bf16.mxu0 0
      %970 = vmatpush1.bf16.msra.mxu0 0
      %971 = vmatprep.subr.bf16.mxu0 0
      %972 = vmatpush1.bf16.msra.mxu0 0
      %973 = vmatprep.subr.bf16.mxu0 0
      %974 = vmatpush1.bf16.msra.mxu0 0
      %975 = vmatprep.subr.bf16.mxu0 0
      %976 = vmatpush1.bf16.msra.mxu0 0
      %977 = vmatprep.subr.bf16.mxu0 0
      %978 = vmatpush1.bf16.msra.mxu0 0
      %979 = vmatprep.subr.bf16.mxu0 0
      %980 = vmatpush1.bf16.msra.mxu0 0
      %981 = vmatprep.subr.bf16.mxu0 0
      %982 = vmatpush1.bf16.msra.mxu0 0
      %983 = vmatprep.subr.bf16.mxu0 0
      %984 = vmatpush1.bf16.msra.mxu0 0
      %985 = vmatprep.subr.bf16.mxu0 0
      %986 = vmatpush1.bf16.msra.mxu0 0
      %987 = vmatprep.subr.bf16.mxu0 0
      %988 = vmatpush1.bf16.msra.mxu0 0
      %989 = vmatprep.subr.bf16.mxu0 0
      %990 = vmatpush1.bf16.msra.mxu0 0
      %991 = vmatprep.subr.bf16.mxu0 0
      %992 = vmatpush1.bf16.msra.mxu0 0
      %993 = vmatprep.mubr.bf16.mxu0 0
      %994 = vmatmul.mubr.bf16.gmra.mrb[0].mxu0 %v592
      %v995 = vpop.f32.mrb[0].mxu0
      %v996 = vadd.f32 %v944, %v995
      %v997 = vpop.f32.mrb[0].mxu0
      %v998 = vpop.f32.mrb[0].mxu0
      %v999 = vpop.f32.mrb[0].mxu0
      %1000 = vdwg.mxu0
      %v1001 = vtanh.pop %v996
      %v1002 = vpack.c.bf16 %v1001, %v1001
      %s1003 = scalar_lea.vmem [#allocation22], %s207
      %vm1004 = vcmask 253952
      %1005 = vst.msk [vmem:[%s1003] sm:$0x1] %vm1004, %v1002
      %1007 = vrot.lane.b32.xlu0 %v570, 32
      %v1008 = vpop.permute.xlu0 %1007
      %1011 = vrot.lane.b32.xlu0 %v564, 96
      %v1012 = vpop.permute.xlu0 %1011
    $region106: #{tpu_custom_call.1} parent=1 // loop_footer
      %s211 = sadd.s32 1, %s207
    $region107: #{tpu_custom_call.1} parent=1 // loop_footer_branch
      %206 = sbr.rel target = $region103
    $region108: #{tpu_custom_call.1} parent=1 // loop_exit
      _
    %vm1014 = vcmask 254976
    %1015 = vst.msk [vmem:[#allocation2] sm:$0x3] %vm1014, %v212
    %1016 = vst.msk [vmem:[#allocation3] sm:$0x3] %vm1014, %v213
    %1017 = vst.msk [vmem:[#allocation4] sm:$0x3] %vm1014, %v214
    // Predicated region
    $region109: #{tpu_custom_call.1} parent=1 // pred_check
      _
    $region110: #{tpu_custom_call.1} parent=1 // pred_check_branch
      %1019 = sbr.rel (0) target = $region112
    $region111: #{tpu_custom_call.1} parent=1 // pred_region
      %s1021 = ssub.s32 80, 80
      %1022 = vsyncadd [#allocation7], %s1021
      %s1023 = sshll.u32 [#allocation22], 4
      %s1024 = int_to_ptr.vmem [resolvable:$true] %s1023
      %1029 = dma.vmem_to_hbm [thread:$0]  %s1024, 80, %s14, [#allocation7], 16, 16, 1
    $region112: #{tpu_custom_call.1} parent=1 // pred_fallthru
      _
    // Predicated region
    $region113: #{tpu_custom_call.1} parent=1 // pred_check
      _
    $region114: #{tpu_custom_call.1} parent=1 // pred_check_branch
      %1031 = sbr.rel (0) target = $region116
    $region115: #{tpu_custom_call.1} parent=1 // pred_region
      %1032 = dma.done [#allocation7], 80
    $region116: #{tpu_custom_call.1} parent=1 // pred_fallthru
      _
    %1033 = vsyncpa [#allocation6], 1
    %1034 = vsyncpa [#allocation9], 1
    %1035 = vsyncpa [#allocation12], 1
    %1036 = vsyncpa [#allocation15], 1
    %1037 = vsyncpa [#allocation18], 1
    %1038 = vsyncpa [#allocation21], 1
    %1039 = vsyncpa [#allocation7], 1

</llo_original>
